<compile_context>
chip_gen: v5e
topology: v5e:2x2
jax: 0.10.0
libtpu: 0.0.40
codegen_flags: <defaults>
</compile_context>

<pallas_src>
import jax
import jax.numpy as jnp
from jax.experimental import pallas as pl
from jax.experimental.pallas import tpu as pltpu

HIDDEN_DIM = 32
NUM_WEAPONS = 3
NUM_TARGETS = 5
N_ACTIONS = NUM_WEAPONS * NUM_TARGETS + 1   # 16

LEAKY_SLOPE = 0.01          # nn.LeakyReLU default
_MASK_FILL = -1.0e30        # finite "-inf": exp underflows to 0, no NaN if a row is all-masked
_MAX_BLOCK_BATCH = 512      # states per grid step at large batch -> Bt*N = 8192 matmul rows


def _policy_kernel(x_ref, mask_ref, w_ref, sp_ref, out_ref):
    """One grid step: Bt states.

    x_ref   : (Bt*N, H)  flattened token rows (state-major)
    mask_ref: (N, Bt)    int32 validity mask, token-major (states on the lane axis)
    w_ref   : (3H, 2H)   packed [w1 (H,2H) ; w2 (2H,H) in cols 0:H]   (grid-resident)
    sp_ref  : (4, 2H)    packed rows: b1 | b2 | w3 | b3               (grid-resident)
    out_ref : (N, Bt)    token-major per-state softmax policy (lane-dense store)
    """
    H = x_ref.shape[1]
    N, Bt = out_ref.shape
    H2 = 2 * H

    x = x_ref[...]                                        # (Bt*N, H) f32

    # Unpack resident parameters with static slices.
    w1 = w_ref[0:H, :]                                    # (H, 2H)
    w2 = w_ref[H:H + H2, 0:H]                             # (2H, H)
    b1 = sp_ref[0:1, :]                                   # (1, 2H)
    b2 = sp_ref[1:2, 0:H]                                 # (1, H)
    w3 = sp_ref[2:3, 0:H]                                 # (1, H)
    b3 = sp_ref[3:4, 0:1]                                 # (1, 1)

    # Linear 1 + LeakyReLU   (MXU, M = Bt*N rows).  max(v, a*v) == LeakyReLU for a < 1.
    h1 = jnp.dot(x, w1, preferred_element_type=jnp.float32) + b1       # (Bt*N, 2H)
    h1 = jnp.maximum(h1, LEAKY_SLOPE * h1)

    # Linear 2 + LeakyReLU
    h2 = jnp.dot(h1, w2, preferred_element_type=jnp.float32) + b2      # (Bt*N, H)
    h2 = jnp.maximum(h2, LEAKY_SLOPE * h2)

    # Linear 3 (output width 1): VPU multiply + lane reduce instead of a near-empty MXU pass.
    prod = h2 * w3                                        # (Bt*N, H)
    logits = jnp.sum(prod.reshape(Bt, N, H), axis=-1) + b3              # (Bt, N)

    # One small transpose so the whole softmax stage and the output store are lane-dense:
    # (Bt, 16) -> (16, Bt) puts states on the 128-lane axis.
    logits_t = logits.T                                   # (N, Bt)

    # masked_fill + per-state softmax over the N tokens (now the sublane axis).
    valid = mask_ref[...] != 0                            # (N, Bt)
    masked = jnp.where(valid, logits_t, jnp.float32(_MASK_FILL))
    mx = jnp.max(masked, axis=0, keepdims=True)           # (1, Bt)
    e = jnp.exp(masked - mx)                              # (N, Bt)
    s = jnp.sum(e, axis=0, keepdims=True)                 # (1, Bt)
    inv = pl.reciprocal(s, approx=True)                   # EUP approx rcp ...
    inv = inv * (2.0 - s * inv)                           # ... + one Newton step -> f32 accurate
    out_ref[...] = e * inv                                # dense Bt-wide store


def _round_up(x, m):
    return -(-x // m) * m


def _choose_tiles(batch):
    """Pick (Bt, Bp): states per grid step and padded batch.

    * Bt multiple of 128 (when tiling) keeps the (N, Bt) mask/output tiles lane-dense.
    * >=2 grid steps whenever the batch allows, so v7x's two TensorCores split the
      "parallel" axis; single full-array step for small batches.
    * Bt capped at 512 -> ~6-8 MiB live VMEM, safe on v7x's 64 MiB / 32 MiB scoped default.
    """
    if batch <= 128:
        bp = _round_up(max(batch, 8), 8)
        return bp, bp                                      # one step, blocks == full arrays
    bt = min(_MAX_BLOCK_BATCH, _round_up(pl.cdiv(batch, 2), 128))
    bp = _round_up(batch, bt)
    return bt, bp


def _pack_params(params):
    """Pack the six Linear params into two lane-dense slabs (fewer, larger, resident DMAs)."""
    w1, b1, w2, b2, w3, b3 = params
    H = w1.shape[0]
    H2 = 2 * H
    wpack = jnp.zeros((3 * H, H2), jnp.float32)
    wpack = wpack.at[0:H, :].set(w1)                      # (H, 2H)
    wpack = wpack.at[H:3 * H, 0:H].set(w2)                # (2H, H)
    sp = jnp.zeros((4, H2), jnp.float32)
    sp = sp.at[0, :].set(b1.reshape(-1))                  # b1 (2H,)
    sp = sp.at[1, 0:H].set(b2.reshape(-1))                # b2 (H,)
    sp = sp.at[2, 0:H].set(w3.reshape(-1))                # w3 (H,)
    sp = sp.at[3, 0].set(b3.reshape(-1)[0])               # b3 scalar
    return wpack, sp


def policy_forward_batched(states, masks, params):
    """states: (B, N, H) f32, masks: (B, N) bool/int.  Returns policy (B, N) f32."""
    B, N, H = states.shape
    Bt, Bp = _choose_tiles(B)
    pad = Bp - B

    wpack, sp = _pack_params(params)

    x = states.astype(jnp.float32).reshape(B * N, H)
    m = masks.astype(jnp.int32)
    if pad:
        x = jnp.pad(x, ((0, pad * N), (0, 0)))
        m = jnp.pad(m, ((0, pad), (0, 0)))                # padded rows all-masked -> uniform, discarded
    m_t = m.T                                             # (N, Bp): tiny token-major mask

    flops = 2 * Bp * N * (H * 2 * H + 2 * H * H + H)
    bytes_accessed = (Bp * N * H + 2 * Bp * N) * 4 + (wpack.size + sp.size) * 4

    out_t = pl.pallas_call(
        _policy_kernel,
        out_shape=jax.ShapeDtypeStruct((N, Bp), jnp.float32),
        grid=(Bp // Bt,),
        in_specs=[
            pl.BlockSpec((Bt * N, H), lambda b: (b, 0)),          # state rows (streamed, ~2 KiB/state)
            pl.BlockSpec((N, Bt), lambda b: (0, b)),              # mask (streamed, token-major)
            pl.BlockSpec((3 * H, 2 * H), lambda b: (0, 0)),       # packed weights (VMEM-resident)
            pl.BlockSpec((4, 2 * H), lambda b: (0, 0)),           # packed small params (VMEM-resident)
        ],
        out_specs=pl.BlockSpec((N, Bt), lambda b: (0, b)),        # lane-dense Bt-wide stores
        compiler_params=pltpu.CompilerParams(
            dimension_semantics=("parallel",),                    # megacore split on v7x
        ),
        cost_estimate=pl.CostEstimate(
            flops=flops, transcendentals=Bp * N, bytes_accessed=bytes_accessed),
    )(x, m_t, wpack, sp)

    return out_t[:, :B].T                                 # (B, N)


def policy_forward(state, mask, params):
    """Single-state path matching the PyTorch 2-D branch: returns (policy (N,), state)."""
    policy = policy_forward_batched(state[None], mask[None], params)[0]
    return policy, state


def init_params(key, hidden_dim):
    """Deterministic synthetic parameters; layout (in, out) for each Linear."""
    ks = jax.random.split(key, 6)
    scale = 0.1
    w1 = scale * jax.random.normal(ks[0], (hidden_dim, 2 * hidden_dim), jnp.float32)
    b1 = scale * jax.random.normal(ks[1], (1, 2 * hidden_dim), jnp.float32)
    w2 = scale * jax.random.normal(ks[2], (2 * hidden_dim, hidden_dim), jnp.float32)
    b2 = scale * jax.random.normal(ks[3], (1, hidden_dim), jnp.float32)
    w3 = scale * jax.random.normal(ks[4], (hidden_dim, 1), jnp.float32)
    b3 = scale * jax.random.normal(ks[5], (1, 1), jnp.float32)
    return (w1, b1, w2, b2, w3, b3)


def policy_reference(state, mask, params):
    """Pure-JAX reference mirroring the PyTorch forward (2-D branch)."""
    w1, b1, w2, b2, w3, b3 = params
    leaky = lambda v: jnp.where(v > 0, v, LEAKY_SLOPE * v)
    h = leaky(state @ w1 + b1)
    h = leaky(h @ w2 + b2)
    logits = (h @ w3 + b3).reshape(-1)
    masked = jnp.where(mask.astype(bool), logits, -jnp.inf)
    return jax.nn.softmax(masked, axis=-1)


if __name__ == "__main__":
    key = jax.random.PRNGKey(0)
    k_state, k_mask, k_params, k_state2, k_mask2 = jax.random.split(key, 5)

    params = init_params(k_params, HIDDEN_DIM)

    # Small batch: single grid step (block == full arrays).
    B = 32
    states = jax.random.normal(k_state, (B, N_ACTIONS, HIDDEN_DIM), jnp.float32)
    masks = jax.random.bernoulli(k_mask, 0.7, (B, N_ACTIONS))
    masks = masks.at[:, 0].set(True)          # at least one valid action per state
    policy = jax.block_until_ready(policy_forward_batched(states, masks, params))
    ref = jax.vmap(lambda s, m: policy_reference(s, m, params))(states, masks)
    assert policy.shape == (B, N_ACTIONS)
    assert jnp.allclose(policy, ref, atol=1e-4, rtol=1e-4), "mismatch vs reference (batched)"
    assert jnp.allclose(jnp.sum(policy, axis=-1), 1.0, atol=1e-4), "softmax rows do not sum to 1"

    # Larger ragged batch: exercises multi-step "parallel" grid (2 steps of Bt=256),
    # batch padding, and the lane-dense (N, Bt) output tiles.
    B2 = 300
    states2 = jax.random.normal(k_state2, (B2, N_ACTIONS, HIDDEN_DIM), jnp.float32)
    masks2 = jax.random.bernoulli(k_mask2, 0.7, (B2, N_ACTIONS))
    masks2 = masks2.at[:, 0].set(True)
    policy2 = jax.block_until_ready(policy_forward_batched(states2, masks2, params))
    ref2 = jax.vmap(lambda s, m: policy_reference(s, m, params))(states2, masks2)
    assert policy2.shape == (B2, N_ACTIONS)
    assert jnp.allclose(policy2, ref2, atol=1e-4, rtol=1e-4), "mismatch vs reference (multi-step)"

    # Single-state path, same semantics as the original module (returns (policy, state)).
    p0, shared = policy_forward(states[0], masks[0], params)
    p0 = jax.block_until_ready(p0)
    assert jnp.allclose(p0, ref[0], atol=1e-4, rtol=1e-4), "mismatch vs reference (single)"
    assert shared.shape == states[0].shape

    print("KERNEL_OK")
</pallas_src>

<mosaic_0001>
module attributes {stable_mosaic.version = 11 : i64} {
  func.func @_policy_kernel(%arg0: i32, %arg1: memref<512x32xf32, #tpu.memory_space<vmem>>, %arg2: memref<16x32xi32, #tpu.memory_space<vmem>>, %arg3: memref<96x64xf32, #tpu.memory_space<vmem>>, %arg4: memref<4x64xf32, #tpu.memory_space<vmem>>, %arg5: memref<16x32xf32, #tpu.memory_space<vmem>>) attributes {dimension_semantics = [#tpu.dimension_semantics<parallel>], iteration_bounds = array<i64: 1>, scalar_prefetch = 0 : i64, scratch_operands = 0 : i64, tpu.core_type = #tpu.core_type<tc>, window_params = [{transform_indices = @transform_0, window_bounds = array<i64: 512, 32>}, {transform_indices = @transform_1, window_bounds = array<i64: 16, 32>}, {pipeline_mode = #tpu.pipeline_mode<synchronous>, transform_indices = @transform_2, window_bounds = array<i64: 96, 64>}, {pipeline_mode = #tpu.pipeline_mode<synchronous>, transform_indices = @transform_3, window_bounds = array<i64: 4, 64>}, {transform_indices = @transform_4, window_bounds = array<i64: 16, 32>}]} {
    %c0 = arith.constant 0 : index
    %c0_0 = arith.constant 0 : index
    %0 = vector.load %arg1[%c0, %c0_0] : memref<512x32xf32, #tpu.memory_space<vmem>>, vector<512x32xf32>
    %c0_1 = arith.constant 0 : index
    %c0_2 = arith.constant 0 : index
    %1 = vector.load %arg3[%c0_1, %c0_2] : memref<96x64xf32, #tpu.memory_space<vmem>>, vector<32x64xf32>
    %c32 = arith.constant 32 : index
    %c0_3 = arith.constant 0 : index
    %2 = vector.load %arg3[%c32, %c0_3] : memref<96x64xf32, #tpu.memory_space<vmem>>, vector<64x32xf32>
    %c0_4 = arith.constant 0 : index
    %c0_5 = arith.constant 0 : index
    %3 = vector.load %arg4[%c0_4, %c0_5] : memref<4x64xf32, #tpu.memory_space<vmem>>, vector<1x64xf32>
    %c1 = arith.constant 1 : index
    %c0_6 = arith.constant 0 : index
    %4 = vector.load %arg4[%c1, %c0_6] : memref<4x64xf32, #tpu.memory_space<vmem>>, vector<1x32xf32>
    %c2 = arith.constant 2 : index
    %c0_7 = arith.constant 0 : index
    %5 = vector.load %arg4[%c2, %c0_7] : memref<4x64xf32, #tpu.memory_space<vmem>>, vector<1x32xf32>
    %c3 = arith.constant 3 : index
    %c0_8 = arith.constant 0 : index
    %6 = vector.load %arg4[%c3, %c0_8] : memref<4x64xf32, #tpu.memory_space<vmem>>, vector<1x1xf32>
    %cst = arith.constant dense<0.000000e+00> : vector<512x64xf32>
    %7 = tpu.matmul %0, %1, %cst {dimension_numbers = #tpu.dot_dimension_numbers<[1], [0], [0], [1], [0, 0, 1, 1], [], []>} : vector<512x32xf32>, vector<32x64xf32>, vector<512x64xf32> -> vector<512x64xf32>
    %8 = vector.broadcast %3 : vector<1x64xf32> to vector<512x64xf32>
    %9 = arith.addf %7, %8 : vector<512x64xf32>
    %cst_9 = arith.constant 0.00999999977 : f32
    %10 = vector.broadcast %cst_9 : f32 to vector<512x64xf32>
    %11 = arith.mulf %10, %9 : vector<512x64xf32>
    %12 = arith.maximumf %9, %11 : vector<512x64xf32>
    %cst_10 = arith.constant dense<0.000000e+00> : vector<512x32xf32>
    %13 = tpu.matmul %12, %2, %cst_10 {dimension_numbers = #tpu.dot_dimension_numbers<[1], [0], [0], [1], [0, 0, 1, 1], [], []>} : vector<512x64xf32>, vector<64x32xf32>, vector<512x32xf32> -> vector<512x32xf32>
    %14 = vector.broadcast %4 : vector<1x32xf32> to vector<512x32xf32>
    %15 = arith.addf %13, %14 : vector<512x32xf32>
    %cst_11 = arith.constant 0.00999999977 : f32
    %16 = vector.broadcast %cst_11 : f32 to vector<512x32xf32>
    %17 = arith.mulf %16, %15 : vector<512x32xf32>
    %18 = arith.maximumf %15, %17 : vector<512x32xf32>
    %19 = vector.broadcast %5 : vector<1x32xf32> to vector<512x32xf32>
    %20 = arith.mulf %18, %19 : vector<512x32xf32>
    %21 = vector.shape_cast %20 : vector<512x32xf32> to vector<32x16x32xf32>
    %cst_12 = arith.constant dense<0.000000e+00> : vector<32x16xf32>
    %22 = vector.multi_reduction <add>, %21, %cst_12 [2] : vector<32x16x32xf32> to vector<32x16xf32>
    %23 = vector.broadcast %6 : vector<1x1xf32> to vector<32x16xf32>
    %24 = arith.addf %22, %23 : vector<32x16xf32>
    %25 = tpu.transpose %24, [1, 0] : vector<32x16xf32> -> vector<16x32xf32>
    %c0_13 = arith.constant 0 : index
    %c0_14 = arith.constant 0 : index
    %26 = vector.load %arg2[%c0_13, %c0_14] : memref<16x32xi32, #tpu.memory_space<vmem>>, vector<16x32xi32>
    %c0_i32 = arith.constant 0 : i32
    %27 = vector.broadcast %c0_i32 : i32 to vector<16x32xi32>
    %28 = arith.cmpi ne, %26, %27 : vector<16x32xi32>
    %cst_15 = arith.constant -1.000000e+30 : f32
    %29 = vector.broadcast %cst_15 : f32 to vector<16x32xf32>
    %30 = arith.select %28, %25, %29 : vector<16x32xi1>, vector<16x32xf32>
    %cst_16 = arith.constant dense<0xFF800000> : vector<32xf32>
    %31 = vector.multi_reduction <maximumf>, %30, %cst_16 [0] : vector<16x32xf32> to vector<32xf32>
    %32 = vector.shape_cast %31 : vector<32xf32> to vector<1x32xf32>
    %33 = vector.broadcast %32 : vector<1x32xf32> to vector<16x32xf32>
    %34 = arith.subf %30, %33 : vector<16x32xf32>
    %35 = math.exp %34 : vector<16x32xf32>
    %cst_17 = arith.constant dense<0.000000e+00> : vector<32xf32>
    %36 = vector.multi_reduction <add>, %35, %cst_17 [0] : vector<16x32xf32> to vector<32xf32>
    %37 = vector.shape_cast %36 : vector<32xf32> to vector<1x32xf32>
    %38 = tpu.reciprocal %37 {approx = true} : vector<1x32xf32> -> vector<1x32xf32>
    %39 = arith.mulf %37, %38 : vector<1x32xf32>
    %cst_18 = arith.constant 2.000000e+00 : f32
    %40 = vector.broadcast %cst_18 : f32 to vector<1x32xf32>
    %41 = arith.subf %40, %39 : vector<1x32xf32>
    %42 = arith.mulf %38, %41 : vector<1x32xf32>
    %43 = vector.broadcast %42 : vector<1x32xf32> to vector<16x32xf32>
    %44 = arith.mulf %35, %43 : vector<16x32xf32>
    %c0_19 = arith.constant 0 : index
    %c0_20 = arith.constant 0 : index
    %45 = vector.load %arg5[%c0_19, %c0_20] : memref<16x32xf32, #tpu.memory_space<vmem>>, vector<16x32xf32>
    tpu.vector_store %arg5[%c0_19, %c0_20], %44 {strides = array<i32>} : memref<16x32xf32, #tpu.memory_space<vmem>>, vector<16x32xf32>,
    return
  }
  func.func @transform_0(%arg0: i32) -> (i32, i32) {
    %c0_i32 = arith.constant 0 : i32
    %c0_i32_0 = arith.constant 0 : i32
    return %arg0, %c0_i32 : i32, i32
  }
  func.func @transform_1(%arg0: i32) -> (i32, i32) {
    %c0_i32 = arith.constant 0 : i32
    %c0_i32_0 = arith.constant 0 : i32
    return %c0_i32, %arg0 : i32, i32
  }
  func.func @transform_2(%arg0: i32) -> (i32, i32) {
    %c0_i32 = arith.constant 0 : i32
    %c0_i32_0 = arith.constant 0 : i32
    %c0_i32_1 = arith.constant 0 : i32
    return %c0_i32, %c0_i32_0 : i32, i32
  }
  func.func @transform_3(%arg0: i32) -> (i32, i32) {
    %c0_i32 = arith.constant 0 : i32
    %c0_i32_0 = arith.constant 0 : i32
    %c0_i32_1 = arith.constant 0 : i32
    return %c0_i32, %c0_i32_0 : i32, i32
  }
  func.func @transform_4(%arg0: i32) -> (i32, i32) {
    %c0_i32 = arith.constant 0 : i32
    %c0_i32_0 = arith.constant 0 : i32
    return %c0_i32, %arg0 : i32, i32
  }
}

</mosaic_0001>

<llo_original>
// kernel: tpu_custom_call.1
$region0: #{tpu_custom_call.1}
  #allocation0 [shape = 'u32[]', space=smem, size = 0x4, offset = 0x4, fixed_abs, tag = 'smem constant byte address 0x4 - core index']
  #allocation1 [shape = 'u32[72,128]{1,0:T(1,128)}', space=vmem, size = 0x9000, scoped, tag = 'internal scratch']
  %s0 = inlined_call_operand.vmem [shape: f32[512,32], index: 0, kind: input, shape index: {}]
  %s1 = inlined_call_operand.vmem [shape: s32[16,32], index: 1, kind: input, shape index: {}]
  %s2 = inlined_call_operand.vmem [shape: f32[96,64], index: 2, kind: input, shape index: {}]
  %s3 = inlined_call_operand.vmem [shape: f32[4,64], index: 3, kind: input, shape index: {}]
  %s4 = inlined_call_operand.hbm [shape: f32[16,32], index: 4, kind: output, shape index: {}]
  %s5 = sld [smem:[#allocation0]]
  $region26: #{tpu_custom_call.1} parent=0
    _
  %s7 = ssub.s32 1, %s5
  %s8 = scalar_select 0, %s7, %s5
  $region1: #{tpu_custom_call.1} parent=0
    #allocation2 [shape = 'u8[8192]{0}', space=vmem, size = 0x2000, scoped, tag = 'output window, operand 0, single buffered']
    #allocation3 [shape = 's32[1]{0}', space=sflag, size = 0x4, scoped, tag = 'scoped memory for tpu_custom_call.1']
    %9 = vsyncpa [#allocation3], 0
    // Predicated region
    $region2: #{tpu_custom_call.1} parent=1 // pred_check
      _
    $region3: #{tpu_custom_call.1} parent=1 // pred_check_branch
      %11 = sbr.rel (0) target = $region5
    $region4: #{tpu_custom_call.1} parent=1 // pred_region
      _
    $region5: #{tpu_custom_call.1} parent=1 // pred_fallthru
      _
    // Predicated region
    $region6: #{tpu_custom_call.1} parent=1 // pred_check
      _
    $region7: #{tpu_custom_call.1} parent=1 // pred_check_branch
      %13 = sbr.rel (0) target = $region9
    $region8: #{tpu_custom_call.1} parent=1 // pred_region
      _
    $region9: #{tpu_custom_call.1} parent=1 // pred_fallthru
      _
    // Predicated region
    $region10: #{tpu_custom_call.1} parent=1 // pred_check
      _
    $region11: #{tpu_custom_call.1} parent=1 // pred_check_branch
      %15 = sbr.rel (0) target = $region13
    $region12: #{tpu_custom_call.1} parent=1 // pred_region
      _
    $region13: #{tpu_custom_call.1} parent=1 // pred_fallthru
      _
    // Predicated region
    $region14: #{tpu_custom_call.1} parent=1 // pred_check
      _
    $region15: #{tpu_custom_call.1} parent=1 // pred_check_branch
      %17 = sbr.rel (0) target = $region17
    $region16: #{tpu_custom_call.1} parent=1 // pred_region
      _
    $region17: #{tpu_custom_call.1} parent=1 // pred_fallthru
      _
    %v18 = vld [vmem:[%s0] sm:$0xff]
    %v19 = vld [vmem:[%s0 + $0x8] sm:$0xff]
    %v20 = vld [vmem:[%s0 + $0x10] sm:$0xff]
    %v21 = vld [vmem:[%s0 + $0x18] sm:$0xff]
    %v22 = vld [vmem:[%s0 + $0x20] sm:$0xff]
    %v23 = vld [vmem:[%s0 + $0x28] sm:$0xff]
    %v24 = vld [vmem:[%s0 + $0x30] sm:$0xff]
    %v25 = vld [vmem:[%s0 + $0x38] sm:$0xff]
    %v26 = vld [vmem:[%s0 + $0x40] sm:$0xff]
    %v27 = vld [vmem:[%s0 + $0x48] sm:$0xff]
    %v28 = vld [vmem:[%s0 + $0x50] sm:$0xff]
    %v29 = vld [vmem:[%s0 + $0x58] sm:$0xff]
    %v30 = vld [vmem:[%s0 + $0x60] sm:$0xff]
    %v31 = vld [vmem:[%s0 + $0x68] sm:$0xff]
    %v32 = vld [vmem:[%s0 + $0x70] sm:$0xff]
    %v33 = vld [vmem:[%s0 + $0x78] sm:$0xff]
    %v34 = vld [vmem:[%s0 + $0x80] sm:$0xff]
    %v35 = vld [vmem:[%s0 + $0x88] sm:$0xff]
    %v36 = vld [vmem:[%s0 + $0x90] sm:$0xff]
    %v37 = vld [vmem:[%s0 + $0x98] sm:$0xff]
    %v38 = vld [vmem:[%s0 + $0xa0] sm:$0xff]
    %v39 = vld [vmem:[%s0 + $0xa8] sm:$0xff]
    %v40 = vld [vmem:[%s0 + $0xb0] sm:$0xff]
    %v41 = vld [vmem:[%s0 + $0xb8] sm:$0xff]
    %v42 = vld [vmem:[%s0 + $0xc0] sm:$0xff]
    %v43 = vld [vmem:[%s0 + $0xc8] sm:$0xff]
    %v44 = vld [vmem:[%s0 + $0xd0] sm:$0xff]
    %v45 = vld [vmem:[%s0 + $0xd8] sm:$0xff]
    %v46 = vld [vmem:[%s0 + $0xe0] sm:$0xff]
    %v47 = vld [vmem:[%s0 + $0xe8] sm:$0xff]
    %v48 = vld [vmem:[%s0 + $0xf0] sm:$0xff]
    %v49 = vld [vmem:[%s0 + $0xf8] sm:$0xff]
    %v50 = vld [vmem:[%s0 + $0x100] sm:$0xff]
    %v51 = vld [vmem:[%s0 + $0x108] sm:$0xff]
    %v52 = vld [vmem:[%s0 + $0x110] sm:$0xff]
    %v53 = vld [vmem:[%s0 + $0x118] sm:$0xff]
    %v54 = vld [vmem:[%s0 + $0x120] sm:$0xff]
    %v55 = vld [vmem:[%s0 + $0x128] sm:$0xff]
    %v56 = vld [vmem:[%s0 + $0x130] sm:$0xff]
    %v57 = vld [vmem:[%s0 + $0x138] sm:$0xff]
    %v58 = vld [vmem:[%s0 + $0x140] sm:$0xff]
    %v59 = vld [vmem:[%s0 + $0x148] sm:$0xff]
    %v60 = vld [vmem:[%s0 + $0x150] sm:$0xff]
    %v61 = vld [vmem:[%s0 + $0x158] sm:$0xff]
    %v62 = vld [vmem:[%s0 + $0x160] sm:$0xff]
    %v63 = vld [vmem:[%s0 + $0x168] sm:$0xff]
    %v64 = vld [vmem:[%s0 + $0x170] sm:$0xff]
    %v65 = vld [vmem:[%s0 + $0x178] sm:$0xff]
    %v66 = vld [vmem:[%s0 + $0x180] sm:$0xff]
    %v67 = vld [vmem:[%s0 + $0x188] sm:$0xff]
    %v68 = vld [vmem:[%s0 + $0x190] sm:$0xff]
    %v69 = vld [vmem:[%s0 + $0x198] sm:$0xff]
    %v70 = vld [vmem:[%s0 + $0x1a0] sm:$0xff]
    %v71 = vld [vmem:[%s0 + $0x1a8] sm:$0xff]
    %v72 = vld [vmem:[%s0 + $0x1b0] sm:$0xff]
    %v73 = vld [vmem:[%s0 + $0x1b8] sm:$0xff]
    %v74 = vld [vmem:[%s0 + $0x1c0] sm:$0xff]
    %v75 = vld [vmem:[%s0 + $0x1c8] sm:$0xff]
    %v76 = vld [vmem:[%s0 + $0x1d0] sm:$0xff]
    %v77 = vld [vmem:[%s0 + $0x1d8] sm:$0xff]
    %v78 = vld [vmem:[%s0 + $0x1e0] sm:$0xff]
    %v79 = vld [vmem:[%s0 + $0x1e8] sm:$0xff]
    %v80 = vld [vmem:[%s0 + $0x1f0] sm:$0xff]
    %v81 = vld [vmem:[%s0 + $0x1f8] sm:$0xff]
    %v82 = vld [vmem:[%s2] sm:$0xff]
    %v83 = vld [vmem:[%s2 + $0x8] sm:$0xff]
    %v84 = vld [vmem:[%s2 + $0x10] sm:$0xff]
    %v85 = vld [vmem:[%s2 + $0x18] sm:$0xff]
    %v86 = vld [vmem:[%s2 + $0x20] sm:$0xff]
    %v87 = vld [vmem:[%s2 + $0x28] sm:$0xff]
    %v88 = vld [vmem:[%s2 + $0x30] sm:$0xff]
    %v89 = vld [vmem:[%s2 + $0x38] sm:$0xff]
    %v90 = vld [vmem:[%s2 + $0x40] sm:$0xff]
    %v91 = vld [vmem:[%s2 + $0x48] sm:$0xff]
    %v92 = vld [vmem:[%s2 + $0x50] sm:$0xff]
    %v93 = vld [vmem:[%s2 + $0x58] sm:$0xff]
    %v94 = vld [vmem:[%s3] sm:$0x1]
    %v95 = vld [vmem:[%s3 + $0x1] sm:$0x1]
    %v96 = vld [vmem:[%s3 + $0x2] sm:$0x1]
    %v97 = vld [vmem:[%s3 + $0x3] sm:$0x1]
    %v98 = vperm.slane %v94, 0
    %vm99 = vcmask 261120
    %v101 = vsel %vm99, %v18, 0
    %v104 = vsel %vm99, %v19, 0
    %v107 = vsel %vm99, %v20, 0
    %v110 = vsel %vm99, %v21, 0
    %v113 = vsel %vm99, %v22, 0
    %v116 = vsel %vm99, %v23, 0
    %v119 = vsel %vm99, %v24, 0
    %v122 = vsel %vm99, %v25, 0
    %v125 = vsel %vm99, %v26, 0
    %v128 = vsel %vm99, %v27, 0
    %v131 = vsel %vm99, %v28, 0
    %v134 = vsel %vm99, %v29, 0
    %v137 = vsel %vm99, %v30, 0
    %v140 = vsel %vm99, %v31, 0
    %v143 = vsel %vm99, %v32, 0
    %v146 = vsel %vm99, %v33, 0
    %v149 = vsel %vm99, %v34, 0
    %v152 = vsel %vm99, %v35, 0
    %v155 = vsel %vm99, %v36, 0
    %v158 = vsel %vm99, %v37, 0
    %v161 = vsel %vm99, %v38, 0
    %v164 = vsel %vm99, %v39, 0
    %v167 = vsel %vm99, %v40, 0
    %v170 = vsel %vm99, %v41, 0
    %v173 = vsel %vm99, %v42, 0
    %v176 = vsel %vm99, %v43, 0
    %v179 = vsel %vm99, %v44, 0
    %v182 = vsel %vm99, %v45, 0
    %v185 = vsel %vm99, %v46, 0
    %v188 = vsel %vm99, %v47, 0
    %v191 = vsel %vm99, %v48, 0
    %v194 = vsel %vm99, %v49, 0
    %v197 = vsel %vm99, %v50, 0
    %v200 = vsel %vm99, %v51, 0
    %v203 = vsel %vm99, %v52, 0
    %v206 = vsel %vm99, %v53, 0
    %v209 = vsel %vm99, %v54, 0
    %v212 = vsel %vm99, %v55, 0
    %v215 = vsel %vm99, %v56, 0
    %v218 = vsel %vm99, %v57, 0
    %v221 = vsel %vm99, %v58, 0
    %v224 = vsel %vm99, %v59, 0
    %v227 = vsel %vm99, %v60, 0
    %v230 = vsel %vm99, %v61, 0
    %v233 = vsel %vm99, %v62, 0
    %v236 = vsel %vm99, %v63, 0
    %v239 = vsel %vm99, %v64, 0
    %v242 = vsel %vm99, %v65, 0
    %v245 = vsel %vm99, %v66, 0
    %v248 = vsel %vm99, %v67, 0
    %v251 = vsel %vm99, %v68, 0
    %v254 = vsel %vm99, %v69, 0
    %v257 = vsel %vm99, %v70, 0
    %v260 = vsel %vm99, %v71, 0
    %v263 = vsel %vm99, %v72, 0
    %v266 = vsel %vm99, %v73, 0
    %v269 = vsel %vm99, %v74, 0
    %v272 = vsel %vm99, %v75, 0
    %v275 = vsel %vm99, %v76, 0
    %v278 = vsel %vm99, %v77, 0
    %v281 = vsel %vm99, %v78, 0
    %v284 = vsel %vm99, %v79, 0
    %v287 = vsel %vm99, %v80, 0
    %v290 = vsel %vm99, %v81, 0
    %292 = vmatpush.msra.mxu0 0.0
    %293 = vmatpush.msra.mxu0 0.0
    %294 = vmatpush.msra.mxu0 0.0
    %295 = vmatpush.msra.mxu0 0.0
    %296 = vmatpush.msra.mxu0 0.0
    %297 = vmatpush.msra.mxu0 0.0
    %298 = vmatpush.msra.mxu0 0.0
    %299 = vmatpush.msra.mxu0 0.0
    %300 = vmatpush.msra.mxu0 0.0
    %301 = vmatpush.msra.mxu0 0.0
    %302 = vmatpush.msra.mxu0 0.0
    %303 = vmatpush.msra.mxu0 0.0
    %304 = vmatpush.msra.mxu0 %v85
    %305 = vmatpush.msra.mxu0 %v84
    %306 = vmatpush.msra.mxu0 %v83
    %307 = vmatpush.msra.mxu0 %v82
    %308 = vmatmul.f32.gmra.mxu0 %v101
    %v309 = vpop.f32.mrf.mxu0
    %v310 = vadd.f32 %v98, %v309
    %311 = vmatmul.f32.gmra.mxu0 %v104
    %v312 = vpop.f32.mrf.mxu0
    %v313 = vadd.f32 %v98, %v312
    %314 = vmatmul.f32.gmra.mxu0 %v107
    %v315 = vpop.f32.mrf.mxu0
    %v316 = vadd.f32 %v98, %v315
    %317 = vmatmul.f32.gmra.mxu0 %v110
    %v318 = vpop.f32.mrf.mxu0
    %v319 = vadd.f32 %v98, %v318
    %320 = vmatmul.f32.gmra.mxu0 %v113
    %v321 = vpop.f32.mrf.mxu0
    %v322 = vadd.f32 %v98, %v321
    %323 = vmatmul.f32.gmra.mxu0 %v116
    %v324 = vpop.f32.mrf.mxu0
    %v325 = vadd.f32 %v98, %v324
    %326 = vmatmul.f32.gmra.mxu0 %v119
    %v327 = vpop.f32.mrf.mxu0
    %v328 = vadd.f32 %v98, %v327
    %329 = vmatmul.f32.gmra.mxu0 %v122
    %v330 = vpop.f32.mrf.mxu0
    %v331 = vadd.f32 %v98, %v330
    %332 = vmatmul.f32.gmra.mxu0 %v125
    %v333 = vpop.f32.mrf.mxu0
    %v334 = vadd.f32 %v98, %v333
    %335 = vmatmul.f32.gmra.mxu0 %v128
    %v336 = vpop.f32.mrf.mxu0
    %v337 = vadd.f32 %v98, %v336
    %338 = vmatmul.f32.gmra.mxu0 %v131
    %v339 = vpop.f32.mrf.mxu0
    %v340 = vadd.f32 %v98, %v339
    %341 = vmatmul.f32.gmra.mxu0 %v134
    %v342 = vpop.f32.mrf.mxu0
    %v343 = vadd.f32 %v98, %v342
    %344 = vmatmul.f32.gmra.mxu0 %v137
    %v345 = vpop.f32.mrf.mxu0
    %v346 = vadd.f32 %v98, %v345
    %347 = vmatmul.f32.gmra.mxu0 %v140
    %v348 = vpop.f32.mrf.mxu0
    %v349 = vadd.f32 %v98, %v348
    %350 = vmatmul.f32.gmra.mxu0 %v143
    %v351 = vpop.f32.mrf.mxu0
    %v352 = vadd.f32 %v98, %v351
    %353 = vmatmul.f32.gmra.mxu0 %v146
    %v354 = vpop.f32.mrf.mxu0
    %v355 = vadd.f32 %v98, %v354
    %356 = vmatmul.f32.gmra.mxu0 %v149
    %v357 = vpop.f32.mrf.mxu0
    %v358 = vadd.f32 %v98, %v357
    %359 = vmatmul.f32.gmra.mxu0 %v152
    %v360 = vpop.f32.mrf.mxu0
    %v361 = vadd.f32 %v98, %v360
    %362 = vmatmul.f32.gmra.mxu0 %v155
    %v363 = vpop.f32.mrf.mxu0
    %v364 = vadd.f32 %v98, %v363
    %365 = vmatmul.f32.gmra.mxu0 %v158
    %v366 = vpop.f32.mrf.mxu0
    %v367 = vadd.f32 %v98, %v366
    %368 = vmatmul.f32.gmra.mxu0 %v161
    %v369 = vpop.f32.mrf.mxu0
    %v370 = vadd.f32 %v98, %v369
    %371 = vmatmul.f32.gmra.mxu0 %v164
    %v372 = vpop.f32.mrf.mxu0
    %v373 = vadd.f32 %v98, %v372
    %374 = vmatmul.f32.gmra.mxu0 %v167
    %v375 = vpop.f32.mrf.mxu0
    %v376 = vadd.f32 %v98, %v375
    %377 = vmatmul.f32.gmra.mxu0 %v170
    %v378 = vpop.f32.mrf.mxu0
    %v379 = vadd.f32 %v98, %v378
    %380 = vmatmul.f32.gmra.mxu0 %v173
    %v381 = vpop.f32.mrf.mxu0
    %v382 = vadd.f32 %v98, %v381
    %383 = vmatmul.f32.gmra.mxu0 %v176
    %v384 = vpop.f32.mrf.mxu0
    %v385 = vadd.f32 %v98, %v384
    %386 = vmatmul.f32.gmra.mxu0 %v179
    %v387 = vpop.f32.mrf.mxu0
    %v388 = vadd.f32 %v98, %v387
    %389 = vmatmul.f32.gmra.mxu0 %v182
    %v390 = vpop.f32.mrf.mxu0
    %v391 = vadd.f32 %v98, %v390
    %392 = vmatmul.f32.gmra.mxu0 %v185
    %v393 = vpop.f32.mrf.mxu0
    %v394 = vadd.f32 %v98, %v393
    %395 = vmatmul.f32.gmra.mxu0 %v188
    %v396 = vpop.f32.mrf.mxu0
    %v397 = vadd.f32 %v98, %v396
    %398 = vmatmul.f32.gmra.mxu0 %v191
    %v399 = vpop.f32.mrf.mxu0
    %v400 = vadd.f32 %v98, %v399
    %401 = vmatmul.f32.gmra.mxu0 %v194
    %v402 = vpop.f32.mrf.mxu0
    %v403 = vadd.f32 %v98, %v402
    %404 = vmatmul.f32.gmra.mxu0 %v197
    %v405 = vpop.f32.mrf.mxu0
    %v406 = vadd.f32 %v98, %v405
    %407 = vmatmul.f32.gmra.mxu0 %v200
    %v408 = vpop.f32.mrf.mxu0
    %v409 = vadd.f32 %v98, %v408
    %410 = vmatmul.f32.gmra.mxu0 %v203
    %v411 = vpop.f32.mrf.mxu0
    %v412 = vadd.f32 %v98, %v411
    %413 = vmatmul.f32.gmra.mxu0 %v206
    %v414 = vpop.f32.mrf.mxu0
    %v415 = vadd.f32 %v98, %v414
    %416 = vmatmul.f32.gmra.mxu0 %v209
    %v417 = vpop.f32.mrf.mxu0
    %v418 = vadd.f32 %v98, %v417
    %419 = vmatmul.f32.gmra.mxu0 %v212
    %v420 = vpop.f32.mrf.mxu0
    %v421 = vadd.f32 %v98, %v420
    %422 = vmatmul.f32.gmra.mxu0 %v215
    %v423 = vpop.f32.mrf.mxu0
    %v424 = vadd.f32 %v98, %v423
    %425 = vmatmul.f32.gmra.mxu0 %v218
    %v426 = vpop.f32.mrf.mxu0
    %v427 = vadd.f32 %v98, %v426
    %428 = vmatmul.f32.gmra.mxu0 %v221
    %v429 = vpop.f32.mrf.mxu0
    %v430 = vadd.f32 %v98, %v429
    %431 = vmatmul.f32.gmra.mxu0 %v224
    %v432 = vpop.f32.mrf.mxu0
    %v433 = vadd.f32 %v98, %v432
    %434 = vmatmul.f32.gmra.mxu0 %v227
    %v435 = vpop.f32.mrf.mxu0
    %v436 = vadd.f32 %v98, %v435
    %437 = vmatmul.f32.gmra.mxu0 %v230
    %v438 = vpop.f32.mrf.mxu0
    %v439 = vadd.f32 %v98, %v438
    %440 = vmatmul.f32.gmra.mxu0 %v233
    %v441 = vpop.f32.mrf.mxu0
    %v442 = vadd.f32 %v98, %v441
    %443 = vmatmul.f32.gmra.mxu0 %v236
    %v444 = vpop.f32.mrf.mxu0
    %v445 = vadd.f32 %v98, %v444
    %446 = vmatmul.f32.gmra.mxu0 %v239
    %v447 = vpop.f32.mrf.mxu0
    %v448 = vadd.f32 %v98, %v447
    %449 = vmatmul.f32.gmra.mxu0 %v242
    %v450 = vpop.f32.mrf.mxu0
    %v451 = vadd.f32 %v98, %v450
    %452 = vmatmul.f32.gmra.mxu0 %v245
    %v453 = vpop.f32.mrf.mxu0
    %v454 = vadd.f32 %v98, %v453
    %455 = vmatmul.f32.gmra.mxu0 %v248
    %v456 = vpop.f32.mrf.mxu0
    %v457 = vadd.f32 %v98, %v456
    %458 = vmatmul.f32.gmra.mxu0 %v251
    %v459 = vpop.f32.mrf.mxu0
    %v460 = vadd.f32 %v98, %v459
    %461 = vmatmul.f32.gmra.mxu0 %v254
    %v462 = vpop.f32.mrf.mxu0
    %v463 = vadd.f32 %v98, %v462
    %464 = vmatmul.f32.gmra.mxu0 %v257
    %v465 = vpop.f32.mrf.mxu0
    %v466 = vadd.f32 %v98, %v465
    %467 = vmatmul.f32.gmra.mxu0 %v260
    %v468 = vpop.f32.mrf.mxu0
    %v469 = vadd.f32 %v98, %v468
    %470 = vmatmul.f32.gmra.mxu0 %v263
    %v471 = vpop.f32.mrf.mxu0
    %v472 = vadd.f32 %v98, %v471
    %473 = vmatmul.f32.gmra.mxu0 %v266
    %v474 = vpop.f32.mrf.mxu0
    %v475 = vadd.f32 %v98, %v474
    %476 = vmatmul.f32.gmra.mxu0 %v269
    %v477 = vpop.f32.mrf.mxu0
    %v478 = vadd.f32 %v98, %v477
    %479 = vmatmul.f32.gmra.mxu0 %v272
    %v480 = vpop.f32.mrf.mxu0
    %v481 = vadd.f32 %v98, %v480
    %482 = vmatmul.f32.gmra.mxu0 %v275
    %v483 = vpop.f32.mrf.mxu0
    %v484 = vadd.f32 %v98, %v483
    %485 = vmatmul.f32.gmra.mxu0 %v278
    %v486 = vpop.f32.mrf.mxu0
    %v487 = vadd.f32 %v98, %v486
    %488 = vmatmul.f32.gmra.mxu0 %v281
    %v489 = vpop.f32.mrf.mxu0
    %v490 = vadd.f32 %v98, %v489
    %491 = vmatmul.f32.gmra.mxu0 %v284
    %v492 = vpop.f32.mrf.mxu0
    %v493 = vadd.f32 %v98, %v492
    %494 = vmatmul.f32.gmra.mxu0 %v287
    %v495 = vpop.f32.mrf.mxu0
    %v496 = vadd.f32 %v98, %v495
    %497 = vmatmul.f32.gmra.mxu0 %v290
    %v498 = vpop.f32.mrf.mxu0
    %v499 = vadd.f32 %v98, %v498
    %500 = vdwg.mxu0
    %v501 = vmul.f32 %v310, 0.01
    %v502 = vmul.f32 %v313, 0.01
    %v503 = vmul.f32 %v316, 0.01
    %v504 = vmul.f32 %v319, 0.01
    %v505 = vmul.f32 %v322, 0.01
    %v506 = vmul.f32 %v325, 0.01
    %v507 = vmul.f32 %v328, 0.01
    %v508 = vmul.f32 %v331, 0.01
    %v509 = vmul.f32 %v334, 0.01
    %v510 = vmul.f32 %v337, 0.01
    %v511 = vmul.f32 %v340, 0.01
    %v512 = vmul.f32 %v343, 0.01
    %v513 = vmul.f32 %v346, 0.01
    %v514 = vmul.f32 %v349, 0.01
    %v515 = vmul.f32 %v352, 0.01
    %v516 = vmul.f32 %v355, 0.01
    %v517 = vmul.f32 %v358, 0.01
    %v518 = vmul.f32 %v361, 0.01
    %v519 = vmul.f32 %v364, 0.01
    %v520 = vmul.f32 %v367, 0.01
    %v521 = vmul.f32 %v370, 0.01
    %v522 = vmul.f32 %v373, 0.01
    %v523 = vmul.f32 %v376, 0.01
    %v524 = vmul.f32 %v379, 0.01
    %v525 = vmul.f32 %v382, 0.01
    %v526 = vmul.f32 %v385, 0.01
    %v527 = vmul.f32 %v388, 0.01
    %v528 = vmul.f32 %v391, 0.01
    %v529 = vmul.f32 %v394, 0.01
    %v530 = vmul.f32 %v397, 0.01
    %v531 = vmul.f32 %v400, 0.01
    %v532 = vmul.f32 %v403, 0.01
    %v533 = vmul.f32 %v406, 0.01
    %v534 = vmul.f32 %v409, 0.01
    %v535 = vmul.f32 %v412, 0.01
    %v536 = vmul.f32 %v415, 0.01
    %v537 = vmul.f32 %v418, 0.01
    %v538 = vmul.f32 %v421, 0.01
    %v539 = vmul.f32 %v424, 0.01
    %v540 = vmul.f32 %v427, 0.01
    %v541 = vmul.f32 %v430, 0.01
    %v542 = vmul.f32 %v433, 0.01
    %v543 = vmul.f32 %v436, 0.01
    %v544 = vmul.f32 %v439, 0.01
    %v545 = vmul.f32 %v442, 0.01
    %v546 = vmul.f32 %v445, 0.01
    %v547 = vmul.f32 %v448, 0.01
    %v548 = vmul.f32 %v451, 0.01
    %v549 = vmul.f32 %v454, 0.01
    %v550 = vmul.f32 %v457, 0.01
    %v551 = vmul.f32 %v460, 0.01
    %v552 = vmul.f32 %v463, 0.01
    %v553 = vmul.f32 %v466, 0.01
    %v554 = vmul.f32 %v469, 0.01
    %v555 = vmul.f32 %v472, 0.01
    %v556 = vmul.f32 %v475, 0.01
    %v557 = vmul.f32 %v478, 0.01
    %v558 = vmul.f32 %v481, 0.01
    %v559 = vmul.f32 %v484, 0.01
    %v560 = vmul.f32 %v487, 0.01
    %v561 = vmul.f32 %v490, 0.01
    %v562 = vmul.f32 %v493, 0.01
    %v563 = vmul.f32 %v496, 0.01
    %v564 = vmul.f32 %v499, 0.01
    %v565 = vmax.f32 %v310, %v501
    %v566 = vmax.f32 %v313, %v502
    %v567 = vmax.f32 %v316, %v503
    %v568 = vmax.f32 %v319, %v504
    %v569 = vmax.f32 %v322, %v505
    %v570 = vmax.f32 %v325, %v506
    %v571 = vmax.f32 %v328, %v507
    %v572 = vmax.f32 %v331, %v508
    %v573 = vmax.f32 %v334, %v509
    %v574 = vmax.f32 %v337, %v510
    %v575 = vmax.f32 %v340, %v511
    %v576 = vmax.f32 %v343, %v512
    %v577 = vmax.f32 %v346, %v513
    %v578 = vmax.f32 %v349, %v514
    %v579 = vmax.f32 %v352, %v515
    %v580 = vmax.f32 %v355, %v516
    %v581 = vmax.f32 %v358, %v517
    %v582 = vmax.f32 %v361, %v518
    %v583 = vmax.f32 %v364, %v519
    %v584 = vmax.f32 %v367, %v520
    %v585 = vmax.f32 %v370, %v521
    %v586 = vmax.f32 %v373, %v522
    %v587 = vmax.f32 %v376, %v523
    %v588 = vmax.f32 %v379, %v524
    %v589 = vmax.f32 %v382, %v525
    %v590 = vmax.f32 %v385, %v526
    %v591 = vmax.f32 %v388, %v527
    %v592 = vmax.f32 %v391, %v528
    %v593 = vmax.f32 %v394, %v529
    %v594 = vmax.f32 %v397, %v530
    %v595 = vmax.f32 %v400, %v531
    %v596 = vmax.f32 %v403, %v532
    %v597 = vmax.f32 %v406, %v533
    %v598 = vmax.f32 %v409, %v534
    %v599 = vmax.f32 %v412, %v535
    %v600 = vmax.f32 %v415, %v536
    %v601 = vmax.f32 %v418, %v537
    %v602 = vmax.f32 %v421, %v538
    %v603 = vmax.f32 %v424, %v539
    %v604 = vmax.f32 %v427, %v540
    %v605 = vmax.f32 %v430, %v541
    %v606 = vmax.f32 %v433, %v542
    %v607 = vmax.f32 %v436, %v543
    %v608 = vmax.f32 %v439, %v544
    %v609 = vmax.f32 %v442, %v545
    %v610 = vmax.f32 %v445, %v546
    %v611 = vmax.f32 %v448, %v547
    %v612 = vmax.f32 %v451, %v548
    %v613 = vmax.f32 %v454, %v549
    %v614 = vmax.f32 %v457, %v550
    %v615 = vmax.f32 %v460, %v551
    %v616 = vmax.f32 %v463, %v552
    %v617 = vmax.f32 %v466, %v553
    %v618 = vmax.f32 %v469, %v554
    %v619 = vmax.f32 %v472, %v555
    %v620 = vmax.f32 %v475, %v556
    %v621 = vmax.f32 %v478, %v557
    %v622 = vmax.f32 %v481, %v558
    %v623 = vmax.f32 %v484, %v559
    %v624 = vmax.f32 %v487, %v560
    %v625 = vmax.f32 %v490, %v561
    %v626 = vmax.f32 %v493, %v562
    %v627 = vmax.f32 %v496, %v563
    %v628 = vmax.f32 %v499, %v564
    %v629 = vperm.slane %v95, 0
    %vm630 = vcmask 523264
    %v632 = vsel %vm630, %v565, 0
    %v635 = vsel %vm630, %v566, 0
    %v638 = vsel %vm630, %v567, 0
    %v641 = vsel %vm630, %v568, 0
    %v644 = vsel %vm630, %v569, 0
    %v647 = vsel %vm630, %v570, 0
    %v650 = vsel %vm630, %v571, 0
    %v653 = vsel %vm630, %v572, 0
    %v656 = vsel %vm630, %v573, 0
    %v659 = vsel %vm630, %v574, 0
    %v662 = vsel %vm630, %v575, 0
    %v665 = vsel %vm630, %v576, 0
    %v668 = vsel %vm630, %v577, 0
    %v671 = vsel %vm630, %v578, 0
    %v674 = vsel %vm630, %v579, 0
    %v677 = vsel %vm630, %v580, 0
    %v680 = vsel %vm630, %v581, 0
    %v683 = vsel %vm630, %v582, 0
    %v686 = vsel %vm630, %v583, 0
    %v689 = vsel %vm630, %v584, 0
    %v692 = vsel %vm630, %v585, 0
    %v695 = vsel %vm630, %v586, 0
    %v698 = vsel %vm630, %v587, 0
    %v701 = vsel %vm630, %v588, 0
    %v704 = vsel %vm630, %v589, 0
    %v707 = vsel %vm630, %v590, 0
    %v710 = vsel %vm630, %v591, 0
    %v713 = vsel %vm630, %v592, 0
    %v716 = vsel %vm630, %v593, 0
    %v719 = vsel %vm630, %v594, 0
    %v722 = vsel %vm630, %v595, 0
    %v725 = vsel %vm630, %v596, 0
    %v728 = vsel %vm630, %v597, 0
    %v731 = vsel %vm630, %v598, 0
    %v734 = vsel %vm630, %v599, 0
    %v737 = vsel %vm630, %v600, 0
    %v740 = vsel %vm630, %v601, 0
    %v743 = vsel %vm630, %v602, 0
    %v746 = vsel %vm630, %v603, 0
    %v749 = vsel %vm630, %v604, 0
    %v752 = vsel %vm630, %v605, 0
    %v755 = vsel %vm630, %v606, 0
    %v758 = vsel %vm630, %v607, 0
    %v761 = vsel %vm630, %v608, 0
    %v764 = vsel %vm630, %v609, 0
    %v767 = vsel %vm630, %v610, 0
    %v770 = vsel %vm630, %v611, 0
    %v773 = vsel %vm630, %v612, 0
    %v776 = vsel %vm630, %v613, 0
    %v779 = vsel %vm630, %v614, 0
    %v782 = vsel %vm630, %v615, 0
    %v785 = vsel %vm630, %v616, 0
    %v788 = vsel %vm630, %v617, 0
    %v791 = vsel %vm630, %v618, 0
    %v794 = vsel %vm630, %v619, 0
    %v797 = vsel %vm630, %v620, 0
    %v800 = vsel %vm630, %v621, 0
    %v803 = vsel %vm630, %v622, 0
    %v806 = vsel %vm630, %v623, 0
    %v809 = vsel %vm630, %v624, 0
    %v812 = vsel %vm630, %v625, 0
    %v815 = vsel %vm630, %v626, 0
    %v818 = vsel %vm630, %v627, 0
    %v821 = vsel %vm630, %v628, 0
    %823 = vmatpush.msra.mxu0 0.0
    %824 = vmatpush.msra.mxu0 0.0
    %825 = vmatpush.msra.mxu0 0.0
    %826 = vmatpush.msra.mxu0 0.0
    %827 = vmatpush.msra.mxu0 0.0
    %828 = vmatpush.msra.mxu0 0.0
    %829 = vmatpush.msra.mxu0 0.0
    %830 = vmatpush.msra.mxu0 0.0
    %831 = vmatpush.msra.mxu0 %v93
    %832 = vmatpush.msra.mxu0 %v92
    %833 = vmatpush.msra.mxu0 %v91
    %834 = vmatpush.msra.mxu0 %v90
    %835 = vmatpush.msra.mxu0 %v89
    %836 = vmatpush.msra.mxu0 %v88
    %837 = vmatpush.msra.mxu0 %v87
    %838 = vmatpush.msra.mxu0 %v86
    %839 = vmatmul.f32.gmra.mxu0 %v632
    %v840 = vpop.f32.mrf.mxu0
    %v841 = vadd.f32 %v629, %v840
    %842 = vmatmul.f32.gmra.mxu0 %v635
    %v843 = vpop.f32.mrf.mxu0
    %v844 = vadd.f32 %v629, %v843
    %845 = vmatmul.f32.gmra.mxu0 %v638
    %v846 = vpop.f32.mrf.mxu0
    %v847 = vadd.f32 %v629, %v846
    %848 = vmatmul.f32.gmra.mxu0 %v641
    %v849 = vpop.f32.mrf.mxu0
    %v850 = vadd.f32 %v629, %v849
    %851 = vmatmul.f32.gmra.mxu0 %v644
    %v852 = vpop.f32.mrf.mxu0
    %v853 = vadd.f32 %v629, %v852
    %854 = vmatmul.f32.gmra.mxu0 %v647
    %v855 = vpop.f32.mrf.mxu0
    %v856 = vadd.f32 %v629, %v855
    %857 = vmatmul.f32.gmra.mxu0 %v650
    %v858 = vpop.f32.mrf.mxu0
    %v859 = vadd.f32 %v629, %v858
    %860 = vmatmul.f32.gmra.mxu0 %v653
    %v861 = vpop.f32.mrf.mxu0
    %v862 = vadd.f32 %v629, %v861
    %863 = vmatmul.f32.gmra.mxu0 %v656
    %v864 = vpop.f32.mrf.mxu0
    %v865 = vadd.f32 %v629, %v864
    %866 = vmatmul.f32.gmra.mxu0 %v659
    %v867 = vpop.f32.mrf.mxu0
    %v868 = vadd.f32 %v629, %v867
    %869 = vmatmul.f32.gmra.mxu0 %v662
    %v870 = vpop.f32.mrf.mxu0
    %v871 = vadd.f32 %v629, %v870
    %872 = vmatmul.f32.gmra.mxu0 %v665
    %v873 = vpop.f32.mrf.mxu0
    %v874 = vadd.f32 %v629, %v873
    %875 = vmatmul.f32.gmra.mxu0 %v668
    %v876 = vpop.f32.mrf.mxu0
    %v877 = vadd.f32 %v629, %v876
    %878 = vmatmul.f32.gmra.mxu0 %v671
    %v879 = vpop.f32.mrf.mxu0
    %v880 = vadd.f32 %v629, %v879
    %881 = vmatmul.f32.gmra.mxu0 %v674
    %v882 = vpop.f32.mrf.mxu0
    %v883 = vadd.f32 %v629, %v882
    %884 = vmatmul.f32.gmra.mxu0 %v677
    %v885 = vpop.f32.mrf.mxu0
    %v886 = vadd.f32 %v629, %v885
    %887 = vmatmul.f32.gmra.mxu0 %v680
    %v888 = vpop.f32.mrf.mxu0
    %v889 = vadd.f32 %v629, %v888
    %890 = vmatmul.f32.gmra.mxu0 %v683
    %v891 = vpop.f32.mrf.mxu0
    %v892 = vadd.f32 %v629, %v891
    %893 = vmatmul.f32.gmra.mxu0 %v686
    %v894 = vpop.f32.mrf.mxu0
    %v895 = vadd.f32 %v629, %v894
    %896 = vmatmul.f32.gmra.mxu0 %v689
    %v897 = vpop.f32.mrf.mxu0
    %v898 = vadd.f32 %v629, %v897
    %899 = vmatmul.f32.gmra.mxu0 %v692
    %v900 = vpop.f32.mrf.mxu0
    %v901 = vadd.f32 %v629, %v900
    %902 = vmatmul.f32.gmra.mxu0 %v695
    %v903 = vpop.f32.mrf.mxu0
    %v904 = vadd.f32 %v629, %v903
    %905 = vmatmul.f32.gmra.mxu0 %v698
    %v906 = vpop.f32.mrf.mxu0
    %v907 = vadd.f32 %v629, %v906
    %908 = vmatmul.f32.gmra.mxu0 %v701
    %v909 = vpop.f32.mrf.mxu0
    %v910 = vadd.f32 %v629, %v909
    %911 = vmatmul.f32.gmra.mxu0 %v704
    %v912 = vpop.f32.mrf.mxu0
    %v913 = vadd.f32 %v629, %v912
    %914 = vmatmul.f32.gmra.mxu0 %v707
    %v915 = vpop.f32.mrf.mxu0
    %v916 = vadd.f32 %v629, %v915
    %917 = vmatmul.f32.gmra.mxu0 %v710
    %v918 = vpop.f32.mrf.mxu0
    %v919 = vadd.f32 %v629, %v918
    %920 = vmatmul.f32.gmra.mxu0 %v713
    %v921 = vpop.f32.mrf.mxu0
    %v922 = vadd.f32 %v629, %v921
    %923 = vmatmul.f32.gmra.mxu0 %v716
    %v924 = vpop.f32.mrf.mxu0
    %v925 = vadd.f32 %v629, %v924
    %926 = vmatmul.f32.gmra.mxu0 %v719
    %v927 = vpop.f32.mrf.mxu0
    %v928 = vadd.f32 %v629, %v927
    %929 = vmatmul.f32.gmra.mxu0 %v722
    %v930 = vpop.f32.mrf.mxu0
    %v931 = vadd.f32 %v629, %v930
    %932 = vmatmul.f32.gmra.mxu0 %v725
    %v933 = vpop.f32.mrf.mxu0
    %v934 = vadd.f32 %v629, %v933
    %935 = vmatmul.f32.gmra.mxu0 %v728
    %v936 = vpop.f32.mrf.mxu0
    %v937 = vadd.f32 %v629, %v936
    %938 = vmatmul.f32.gmra.mxu0 %v731
    %v939 = vpop.f32.mrf.mxu0
    %v940 = vadd.f32 %v629, %v939
    %941 = vmatmul.f32.gmra.mxu0 %v734
    %v942 = vpop.f32.mrf.mxu0
    %v943 = vadd.f32 %v629, %v942
    %944 = vmatmul.f32.gmra.mxu0 %v737
    %v945 = vpop.f32.mrf.mxu0
    %v946 = vadd.f32 %v629, %v945
    %947 = vmatmul.f32.gmra.mxu0 %v740
    %v948 = vpop.f32.mrf.mxu0
    %v949 = vadd.f32 %v629, %v948
    %950 = vmatmul.f32.gmra.mxu0 %v743
    %v951 = vpop.f32.mrf.mxu0
    %v952 = vadd.f32 %v629, %v951
    %953 = vmatmul.f32.gmra.mxu0 %v746
    %v954 = vpop.f32.mrf.mxu0
    %v955 = vadd.f32 %v629, %v954
    %956 = vmatmul.f32.gmra.mxu0 %v749
    %v957 = vpop.f32.mrf.mxu0
    %v958 = vadd.f32 %v629, %v957
    %959 = vmatmul.f32.gmra.mxu0 %v752
    %v960 = vpop.f32.mrf.mxu0
    %v961 = vadd.f32 %v629, %v960
    %962 = vmatmul.f32.gmra.mxu0 %v755
    %v963 = vpop.f32.mrf.mxu0
    %v964 = vadd.f32 %v629, %v963
    %965 = vmatmul.f32.gmra.mxu0 %v758
    %v966 = vpop.f32.mrf.mxu0
    %v967 = vadd.f32 %v629, %v966
    %968 = vmatmul.f32.gmra.mxu0 %v761
    %v969 = vpop.f32.mrf.mxu0
    %v970 = vadd.f32 %v629, %v969
    %971 = vmatmul.f32.gmra.mxu0 %v764
    %v972 = vpop.f32.mrf.mxu0
    %v973 = vadd.f32 %v629, %v972
    %974 = vmatmul.f32.gmra.mxu0 %v767
    %v975 = vpop.f32.mrf.mxu0
    %v976 = vadd.f32 %v629, %v975
    %977 = vmatmul.f32.gmra.mxu0 %v770
    %v978 = vpop.f32.mrf.mxu0
    %v979 = vadd.f32 %v629, %v978
    %980 = vmatmul.f32.gmra.mxu0 %v773
    %v981 = vpop.f32.mrf.mxu0
    %v982 = vadd.f32 %v629, %v981
    %983 = vmatmul.f32.gmra.mxu0 %v776
    %v984 = vpop.f32.mrf.mxu0
    %v985 = vadd.f32 %v629, %v984
    %986 = vmatmul.f32.gmra.mxu0 %v779
    %v987 = vpop.f32.mrf.mxu0
    %v988 = vadd.f32 %v629, %v987
    %989 = vmatmul.f32.gmra.mxu0 %v782
    %v990 = vpop.f32.mrf.mxu0
    %v991 = vadd.f32 %v629, %v990
    %992 = vmatmul.f32.gmra.mxu0 %v785
    %v993 = vpop.f32.mrf.mxu0
    %v994 = vadd.f32 %v629, %v993
    %995 = vmatmul.f32.gmra.mxu0 %v788
    %v996 = vpop.f32.mrf.mxu0
    %v997 = vadd.f32 %v629, %v996
    %998 = vmatmul.f32.gmra.mxu0 %v791
    %v999 = vpop.f32.mrf.mxu0
    %v1000 = vadd.f32 %v629, %v999
    %1001 = vmatmul.f32.gmra.mxu0 %v794
    %v1002 = vpop.f32.mrf.mxu0
    %v1003 = vadd.f32 %v629, %v1002
    %1004 = vmatmul.f32.gmra.mxu0 %v797
    %v1005 = vpop.f32.mrf.mxu0
    %v1006 = vadd.f32 %v629, %v1005
    %1007 = vmatmul.f32.gmra.mxu0 %v800
    %v1008 = vpop.f32.mrf.mxu0
    %v1009 = vadd.f32 %v629, %v1008
    %1010 = vmatmul.f32.gmra.mxu0 %v803
    %v1011 = vpop.f32.mrf.mxu0
    %v1012 = vadd.f32 %v629, %v1011
    %1013 = vmatmul.f32.gmra.mxu0 %v806
    %v1014 = vpop.f32.mrf.mxu0
    %v1015 = vadd.f32 %v629, %v1014
    %1016 = vmatmul.f32.gmra.mxu0 %v809
    %v1017 = vpop.f32.mrf.mxu0
    %v1018 = vadd.f32 %v629, %v1017
    %1019 = vmatmul.f32.gmra.mxu0 %v812
    %v1020 = vpop.f32.mrf.mxu0
    %v1021 = vadd.f32 %v629, %v1020
    %1022 = vmatmul.f32.gmra.mxu0 %v815
    %v1023 = vpop.f32.mrf.mxu0
    %v1024 = vadd.f32 %v629, %v1023
    %1025 = vmatmul.f32.gmra.mxu0 %v818
    %v1026 = vpop.f32.mrf.mxu0
    %v1027 = vadd.f32 %v629, %v1026
    %1028 = vmatmul.f32.gmra.mxu0 %v821
    %v1029 = vpop.f32.mrf.mxu0
    %v1030 = vadd.f32 %v629, %v1029
    %1031 = vdwg.mxu0
    %v1032 = vmul.f32 %v841, 0.01
    %v1033 = vmul.f32 %v844, 0.01
    %v1034 = vmul.f32 %v847, 0.01
    %v1035 = vmul.f32 %v850, 0.01
    %v1036 = vmul.f32 %v853, 0.01
    %v1037 = vmul.f32 %v856, 0.01
    %v1038 = vmul.f32 %v859, 0.01
    %v1039 = vmul.f32 %v862, 0.01
    %v1040 = vmul.f32 %v865, 0.01
    %v1041 = vmul.f32 %v868, 0.01
    %v1042 = vmul.f32 %v871, 0.01
    %v1043 = vmul.f32 %v874, 0.01
    %v1044 = vmul.f32 %v877, 0.01
    %v1045 = vmul.f32 %v880, 0.01
    %v1046 = vmul.f32 %v883, 0.01
    %v1047 = vmul.f32 %v886, 0.01
    %v1048 = vmul.f32 %v889, 0.01
    %v1049 = vmul.f32 %v892, 0.01
    %v1050 = vmul.f32 %v895, 0.01
    %v1051 = vmul.f32 %v898, 0.01
    %v1052 = vmul.f32 %v901, 0.01
    %v1053 = vmul.f32 %v904, 0.01
    %v1054 = vmul.f32 %v907, 0.01
    %v1055 = vmul.f32 %v910, 0.01
    %v1056 = vmul.f32 %v913, 0.01
    %v1057 = vmul.f32 %v916, 0.01
    %v1058 = vmul.f32 %v919, 0.01
    %v1059 = vmul.f32 %v922, 0.01
    %v1060 = vmul.f32 %v925, 0.01
    %v1061 = vmul.f32 %v928, 0.01
    %v1062 = vmul.f32 %v931, 0.01
    %v1063 = vmul.f32 %v934, 0.01
    %v1064 = vmul.f32 %v937, 0.01
    %v1065 = vmul.f32 %v940, 0.01
    %v1066 = vmul.f32 %v943, 0.01
    %v1067 = vmul.f32 %v946, 0.01
    %v1068 = vmul.f32 %v949, 0.01
    %v1069 = vmul.f32 %v952, 0.01
    %v1070 = vmul.f32 %v955, 0.01
    %v1071 = vmul.f32 %v958, 0.01
    %v1072 = vmul.f32 %v961, 0.01
    %v1073 = vmul.f32 %v964, 0.01
    %v1074 = vmul.f32 %v967, 0.01
    %v1075 = vmul.f32 %v970, 0.01
    %v1076 = vmul.f32 %v973, 0.01
    %v1077 = vmul.f32 %v976, 0.01
    %v1078 = vmul.f32 %v979, 0.01
    %v1079 = vmul.f32 %v982, 0.01
    %v1080 = vmul.f32 %v985, 0.01
    %v1081 = vmul.f32 %v988, 0.01
    %v1082 = vmul.f32 %v991, 0.01
    %v1083 = vmul.f32 %v994, 0.01
    %v1084 = vmul.f32 %v997, 0.01
    %v1085 = vmul.f32 %v1000, 0.01
    %v1086 = vmul.f32 %v1003, 0.01
    %v1087 = vmul.f32 %v1006, 0.01
    %v1088 = vmul.f32 %v1009, 0.01
    %v1089 = vmul.f32 %v1012, 0.01
    %v1090 = vmul.f32 %v1015, 0.01
    %v1091 = vmul.f32 %v1018, 0.01
    %v1092 = vmul.f32 %v1021, 0.01
    %v1093 = vmul.f32 %v1024, 0.01
    %v1094 = vmul.f32 %v1027, 0.01
    %v1095 = vmul.f32 %v1030, 0.01
    %v1096 = vmax.f32 %v841, %v1032
    %v1097 = vmax.f32 %v844, %v1033
    %v1098 = vmax.f32 %v847, %v1034
    %v1099 = vmax.f32 %v850, %v1035
    %v1100 = vmax.f32 %v853, %v1036
    %v1101 = vmax.f32 %v856, %v1037
    %v1102 = vmax.f32 %v859, %v1038
    %v1103 = vmax.f32 %v862, %v1039
    %v1104 = vmax.f32 %v865, %v1040
    %v1105 = vmax.f32 %v868, %v1041
    %v1106 = vmax.f32 %v871, %v1042
    %v1107 = vmax.f32 %v874, %v1043
    %v1108 = vmax.f32 %v877, %v1044
    %v1109 = vmax.f32 %v880, %v1045
    %v1110 = vmax.f32 %v883, %v1046
    %v1111 = vmax.f32 %v886, %v1047
    %v1112 = vmax.f32 %v889, %v1048
    %v1113 = vmax.f32 %v892, %v1049
    %v1114 = vmax.f32 %v895, %v1050
    %v1115 = vmax.f32 %v898, %v1051
    %v1116 = vmax.f32 %v901, %v1052
    %v1117 = vmax.f32 %v904, %v1053
    %v1118 = vmax.f32 %v907, %v1054
    %v1119 = vmax.f32 %v910, %v1055
    %v1120 = vmax.f32 %v913, %v1056
    %v1121 = vmax.f32 %v916, %v1057
    %v1122 = vmax.f32 %v919, %v1058
    %v1123 = vmax.f32 %v922, %v1059
    %v1124 = vmax.f32 %v925, %v1060
    %v1125 = vmax.f32 %v928, %v1061
    %v1126 = vmax.f32 %v931, %v1062
    %v1127 = vmax.f32 %v934, %v1063
    %v1128 = vmax.f32 %v937, %v1064
    %v1129 = vmax.f32 %v940, %v1065
    %v1130 = vmax.f32 %v943, %v1066
    %v1131 = vmax.f32 %v946, %v1067
    %v1132 = vmax.f32 %v949, %v1068
    %v1133 = vmax.f32 %v952, %v1069
    %v1134 = vmax.f32 %v955, %v1070
    %v1135 = vmax.f32 %v958, %v1071
    %v1136 = vmax.f32 %v961, %v1072
    %v1137 = vmax.f32 %v964, %v1073
    %v1138 = vmax.f32 %v967, %v1074
    %v1139 = vmax.f32 %v970, %v1075
    %v1140 = vmax.f32 %v973, %v1076
    %v1141 = vmax.f32 %v976, %v1077
    %v1142 = vmax.f32 %v979, %v1078
    %v1143 = vmax.f32 %v982, %v1079
    %v1144 = vmax.f32 %v985, %v1080
    %v1145 = vmax.f32 %v988, %v1081
    %v1146 = vmax.f32 %v991, %v1082
    %v1147 = vmax.f32 %v994, %v1083
    %v1148 = vmax.f32 %v997, %v1084
    %v1149 = vmax.f32 %v1000, %v1085
    %v1150 = vmax.f32 %v1003, %v1086
    %v1151 = vmax.f32 %v1006, %v1087
    %v1152 = vmax.f32 %v1009, %v1088
    %v1153 = vmax.f32 %v1012, %v1089
    %v1154 = vmax.f32 %v1015, %v1090
    %v1155 = vmax.f32 %v1018, %v1091
    %v1156 = vmax.f32 %v1021, %v1092
    %v1157 = vmax.f32 %v1024, %v1093
    %v1158 = vmax.f32 %v1027, %v1094
    %v1159 = vmax.f32 %v1030, %v1095
    %v1160 = vperm.slane %v96, 0
    %v1161 = vmul.f32 %v1096, %v1160
    %v1162 = vmul.f32 %v1097, %v1160
    %v1163 = vmul.f32 %v1098, %v1160
    %v1164 = vmul.f32 %v1099, %v1160
    %v1165 = vmul.f32 %v1100, %v1160
    %v1166 = vmul.f32 %v1101, %v1160
    %v1167 = vmul.f32 %v1102, %v1160
    %v1168 = vmul.f32 %v1103, %v1160
    %v1169 = vmul.f32 %v1104, %v1160
    %v1170 = vmul.f32 %v1105, %v1160
    %v1171 = vmul.f32 %v1106, %v1160
    %v1172 = vmul.f32 %v1107, %v1160
    %v1173 = vmul.f32 %v1108, %v1160
    %v1174 = vmul.f32 %v1109, %v1160
    %v1175 = vmul.f32 %v1110, %v1160
    %v1176 = vmul.f32 %v1111, %v1160
    %v1177 = vmul.f32 %v1112, %v1160
    %v1178 = vmul.f32 %v1113, %v1160
    %v1179 = vmul.f32 %v1114, %v1160
    %v1180 = vmul.f32 %v1115, %v1160
    %v1181 = vmul.f32 %v1116, %v1160
    %v1182 = vmul.f32 %v1117, %v1160
    %v1183 = vmul.f32 %v1118, %v1160
    %v1184 = vmul.f32 %v1119, %v1160
    %v1185 = vmul.f32 %v1120, %v1160
    %v1186 = vmul.f32 %v1121, %v1160
    %v1187 = vmul.f32 %v1122, %v1160
    %v1188 = vmul.f32 %v1123, %v1160
    %v1189 = vmul.f32 %v1124, %v1160
    %v1190 = vmul.f32 %v1125, %v1160
    %v1191 = vmul.f32 %v1126, %v1160
    %v1192 = vmul.f32 %v1127, %v1160
    %v1193 = vmul.f32 %v1128, %v1160
    %v1194 = vmul.f32 %v1129, %v1160
    %v1195 = vmul.f32 %v1130, %v1160
    %v1196 = vmul.f32 %v1131, %v1160
    %v1197 = vmul.f32 %v1132, %v1160
    %v1198 = vmul.f32 %v1133, %v1160
    %v1199 = vmul.f32 %v1134, %v1160
    %v1200 = vmul.f32 %v1135, %v1160
    %v1201 = vmul.f32 %v1136, %v1160
    %v1202 = vmul.f32 %v1137, %v1160
    %v1203 = vmul.f32 %v1138, %v1160
    %v1204 = vmul.f32 %v1139, %v1160
    %v1205 = vmul.f32 %v1140, %v1160
    %v1206 = vmul.f32 %v1141, %v1160
    %v1207 = vmul.f32 %v1142, %v1160
    %v1208 = vmul.f32 %v1143, %v1160
    %v1209 = vmul.f32 %v1144, %v1160
    %v1210 = vmul.f32 %v1145, %v1160
    %v1211 = vmul.f32 %v1146, %v1160
    %v1212 = vmul.f32 %v1147, %v1160
    %v1213 = vmul.f32 %v1148, %v1160
    %v1214 = vmul.f32 %v1149, %v1160
    %v1215 = vmul.f32 %v1150, %v1160
    %v1216 = vmul.f32 %v1151, %v1160
    %v1217 = vmul.f32 %v1152, %v1160
    %v1218 = vmul.f32 %v1153, %v1160
    %v1219 = vmul.f32 %v1154, %v1160
    %v1220 = vmul.f32 %v1155, %v1160
    %v1221 = vmul.f32 %v1156, %v1160
    %v1222 = vmul.f32 %v1157, %v1160
    %v1223 = vmul.f32 %v1158, %v1160
    %v1224 = vmul.f32 %v1159, %v1160
    %v1225 = vsel %vm99, %v1161, 0.0
    %1226 = vadd.xlane.f32.xlu0 %v1225
    %v1227 = vpop.xlane.xlu0 %1226
    %v1228 = vsel %vm99, %v1162, 0.0
    %1229 = vadd.xlane.f32.xlu0 %v1228
    %v1230 = vpop.xlane.xlu0 %1229
    %v1231 = vsel %vm99, %v1163, 0.0
    %1232 = vadd.xlane.f32.xlu0 %v1231
    %v1233 = vpop.xlane.xlu0 %1232
    %v1234 = vsel %vm99, %v1164, 0.0
    %1235 = vadd.xlane.f32.xlu0 %v1234
    %v1236 = vpop.xlane.xlu0 %1235
    %v1237 = vsel %vm99, %v1165, 0.0
    %1238 = vadd.xlane.f32.xlu0 %v1237
    %v1239 = vpop.xlane.xlu0 %1238
    %v1240 = vsel %vm99, %v1166, 0.0
    %1241 = vadd.xlane.f32.xlu0 %v1240
    %v1242 = vpop.xlane.xlu0 %1241
    %v1243 = vsel %vm99, %v1167, 0.0
    %1244 = vadd.xlane.f32.xlu0 %v1243
    %v1245 = vpop.xlane.xlu0 %1244
    %v1246 = vsel %vm99, %v1168, 0.0
    %1247 = vadd.xlane.f32.xlu0 %v1246
    %v1248 = vpop.xlane.xlu0 %1247
    %v1249 = vsel %vm99, %v1169, 0.0
    %1250 = vadd.xlane.f32.xlu0 %v1249
    %v1251 = vpop.xlane.xlu0 %1250
    %v1252 = vsel %vm99, %v1170, 0.0
    %1253 = vadd.xlane.f32.xlu0 %v1252
    %v1254 = vpop.xlane.xlu0 %1253
    %v1255 = vsel %vm99, %v1171, 0.0
    %1256 = vadd.xlane.f32.xlu0 %v1255
    %v1257 = vpop.xlane.xlu0 %1256
    %v1258 = vsel %vm99, %v1172, 0.0
    %1259 = vadd.xlane.f32.xlu0 %v1258
    %v1260 = vpop.xlane.xlu0 %1259
    %v1261 = vsel %vm99, %v1173, 0.0
    %1262 = vadd.xlane.f32.xlu0 %v1261
    %v1263 = vpop.xlane.xlu0 %1262
    %v1264 = vsel %vm99, %v1174, 0.0
    %1265 = vadd.xlane.f32.xlu0 %v1264
    %v1266 = vpop.xlane.xlu0 %1265
    %v1267 = vsel %vm99, %v1175, 0.0
    %1268 = vadd.xlane.f32.xlu0 %v1267
    %v1269 = vpop.xlane.xlu0 %1268
    %v1270 = vsel %vm99, %v1176, 0.0
    %1271 = vadd.xlane.f32.xlu0 %v1270
    %v1272 = vpop.xlane.xlu0 %1271
    %v1273 = vsel %vm99, %v1177, 0.0
    %1274 = vadd.xlane.f32.xlu0 %v1273
    %v1275 = vpop.xlane.xlu0 %1274
    %v1276 = vsel %vm99, %v1178, 0.0
    %1277 = vadd.xlane.f32.xlu0 %v1276
    %v1278 = vpop.xlane.xlu0 %1277
    %v1279 = vsel %vm99, %v1179, 0.0
    %1280 = vadd.xlane.f32.xlu0 %v1279
    %v1281 = vpop.xlane.xlu0 %1280
    %v1282 = vsel %vm99, %v1180, 0.0
    %1283 = vadd.xlane.f32.xlu0 %v1282
    %v1284 = vpop.xlane.xlu0 %1283
    %v1285 = vsel %vm99, %v1181, 0.0
    %1286 = vadd.xlane.f32.xlu0 %v1285
    %v1287 = vpop.xlane.xlu0 %1286
    %v1288 = vsel %vm99, %v1182, 0.0
    %1289 = vadd.xlane.f32.xlu0 %v1288
    %v1290 = vpop.xlane.xlu0 %1289
    %v1291 = vsel %vm99, %v1183, 0.0
    %1292 = vadd.xlane.f32.xlu0 %v1291
    %v1293 = vpop.xlane.xlu0 %1292
    %v1294 = vsel %vm99, %v1184, 0.0
    %1295 = vadd.xlane.f32.xlu0 %v1294
    %v1296 = vpop.xlane.xlu0 %1295
    %v1297 = vsel %vm99, %v1185, 0.0
    %1298 = vadd.xlane.f32.xlu0 %v1297
    %v1299 = vpop.xlane.xlu0 %1298
    %v1300 = vsel %vm99, %v1186, 0.0
    %1301 = vadd.xlane.f32.xlu0 %v1300
    %v1302 = vpop.xlane.xlu0 %1301
    %v1303 = vsel %vm99, %v1187, 0.0
    %1304 = vadd.xlane.f32.xlu0 %v1303
    %v1305 = vpop.xlane.xlu0 %1304
    %v1306 = vsel %vm99, %v1188, 0.0
    %1307 = vadd.xlane.f32.xlu0 %v1306
    %v1308 = vpop.xlane.xlu0 %1307
    %v1309 = vsel %vm99, %v1189, 0.0
    %1310 = vadd.xlane.f32.xlu0 %v1309
    %v1311 = vpop.xlane.xlu0 %1310
    %v1312 = vsel %vm99, %v1190, 0.0
    %1313 = vadd.xlane.f32.xlu0 %v1312
    %v1314 = vpop.xlane.xlu0 %1313
    %v1315 = vsel %vm99, %v1191, 0.0
    %1316 = vadd.xlane.f32.xlu0 %v1315
    %v1317 = vpop.xlane.xlu0 %1316
    %v1318 = vsel %vm99, %v1192, 0.0
    %1319 = vadd.xlane.f32.xlu0 %v1318
    %v1320 = vpop.xlane.xlu0 %1319
    %v1321 = vsel %vm99, %v1193, 0.0
    %1322 = vadd.xlane.f32.xlu0 %v1321
    %v1323 = vpop.xlane.xlu0 %1322
    %v1324 = vsel %vm99, %v1194, 0.0
    %1325 = vadd.xlane.f32.xlu0 %v1324
    %v1326 = vpop.xlane.xlu0 %1325
    %v1327 = vsel %vm99, %v1195, 0.0
    %1328 = vadd.xlane.f32.xlu0 %v1327
    %v1329 = vpop.xlane.xlu0 %1328
    %v1330 = vsel %vm99, %v1196, 0.0
    %1331 = vadd.xlane.f32.xlu0 %v1330
    %v1332 = vpop.xlane.xlu0 %1331
    %v1333 = vsel %vm99, %v1197, 0.0
    %1334 = vadd.xlane.f32.xlu0 %v1333
    %v1335 = vpop.xlane.xlu0 %1334
    %v1336 = vsel %vm99, %v1198, 0.0
    %1337 = vadd.xlane.f32.xlu0 %v1336
    %v1338 = vpop.xlane.xlu0 %1337
    %v1339 = vsel %vm99, %v1199, 0.0
    %1340 = vadd.xlane.f32.xlu0 %v1339
    %v1341 = vpop.xlane.xlu0 %1340
    %v1342 = vsel %vm99, %v1200, 0.0
    %1343 = vadd.xlane.f32.xlu0 %v1342
    %v1344 = vpop.xlane.xlu0 %1343
    %v1345 = vsel %vm99, %v1201, 0.0
    %1346 = vadd.xlane.f32.xlu0 %v1345
    %v1347 = vpop.xlane.xlu0 %1346
    %v1348 = vsel %vm99, %v1202, 0.0
    %1349 = vadd.xlane.f32.xlu0 %v1348
    %v1350 = vpop.xlane.xlu0 %1349
    %v1351 = vsel %vm99, %v1203, 0.0
    %1352 = vadd.xlane.f32.xlu0 %v1351
    %v1353 = vpop.xlane.xlu0 %1352
    %v1354 = vsel %vm99, %v1204, 0.0
    %1355 = vadd.xlane.f32.xlu0 %v1354
    %v1356 = vpop.xlane.xlu0 %1355
    %v1357 = vsel %vm99, %v1205, 0.0
    %1358 = vadd.xlane.f32.xlu0 %v1357
    %v1359 = vpop.xlane.xlu0 %1358
    %v1360 = vsel %vm99, %v1206, 0.0
    %1361 = vadd.xlane.f32.xlu0 %v1360
    %v1362 = vpop.xlane.xlu0 %1361
    %v1363 = vsel %vm99, %v1207, 0.0
    %1364 = vadd.xlane.f32.xlu0 %v1363
    %v1365 = vpop.xlane.xlu0 %1364
    %v1366 = vsel %vm99, %v1208, 0.0
    %1367 = vadd.xlane.f32.xlu0 %v1366
    %v1368 = vpop.xlane.xlu0 %1367
    %v1369 = vsel %vm99, %v1209, 0.0
    %1370 = vadd.xlane.f32.xlu0 %v1369
    %v1371 = vpop.xlane.xlu0 %1370
    %v1372 = vsel %vm99, %v1210, 0.0
    %1373 = vadd.xlane.f32.xlu0 %v1372
    %v1374 = vpop.xlane.xlu0 %1373
    %v1375 = vsel %vm99, %v1211, 0.0
    %1376 = vadd.xlane.f32.xlu0 %v1375
    %v1377 = vpop.xlane.xlu0 %1376
    %v1378 = vsel %vm99, %v1212, 0.0
    %1379 = vadd.xlane.f32.xlu0 %v1378
    %v1380 = vpop.xlane.xlu0 %1379
    %v1381 = vsel %vm99, %v1213, 0.0
    %1382 = vadd.xlane.f32.xlu0 %v1381
    %v1383 = vpop.xlane.xlu0 %1382
    %v1384 = vsel %vm99, %v1214, 0.0
    %1385 = vadd.xlane.f32.xlu0 %v1384
    %v1386 = vpop.xlane.xlu0 %1385
    %v1387 = vsel %vm99, %v1215, 0.0
    %1388 = vadd.xlane.f32.xlu0 %v1387
    %v1389 = vpop.xlane.xlu0 %1388
    %v1390 = vsel %vm99, %v1216, 0.0
    %1391 = vadd.xlane.f32.xlu0 %v1390
    %v1392 = vpop.xlane.xlu0 %1391
    %v1393 = vsel %vm99, %v1217, 0.0
    %1394 = vadd.xlane.f32.xlu0 %v1393
    %v1395 = vpop.xlane.xlu0 %1394
    %v1396 = vsel %vm99, %v1218, 0.0
    %1397 = vadd.xlane.f32.xlu0 %v1396
    %v1398 = vpop.xlane.xlu0 %1397
    %v1399 = vsel %vm99, %v1219, 0.0
    %1400 = vadd.xlane.f32.xlu0 %v1399
    %v1401 = vpop.xlane.xlu0 %1400
    %v1402 = vsel %vm99, %v1220, 0.0
    %1403 = vadd.xlane.f32.xlu0 %v1402
    %v1404 = vpop.xlane.xlu0 %1403
    %v1405 = vsel %vm99, %v1221, 0.0
    %1406 = vadd.xlane.f32.xlu0 %v1405
    %v1407 = vpop.xlane.xlu0 %1406
    %v1408 = vsel %vm99, %v1222, 0.0
    %1409 = vadd.xlane.f32.xlu0 %v1408
    %v1410 = vpop.xlane.xlu0 %1409
    %v1411 = vsel %vm99, %v1223, 0.0
    %1412 = vadd.xlane.f32.xlu0 %v1411
    %v1413 = vpop.xlane.xlu0 %1412
    %v1414 = vsel %vm99, %v1224, 0.0
    %1415 = vadd.xlane.f32.xlu0 %v1414
    %v1416 = vpop.xlane.xlu0 %1415
    %s1418 = vtos %v97
    %v1419 = vstv %s1418
    %v1421 = vadd.f32 %v1227, %v1419
    %v1422 = vadd.f32 %v1230, %v1419
    %v1423 = vadd.f32 %v1233, %v1419
    %v1424 = vadd.f32 %v1236, %v1419
    %v1425 = vadd.f32 %v1239, %v1419
    %v1426 = vadd.f32 %v1242, %v1419
    %v1427 = vadd.f32 %v1245, %v1419
    %v1428 = vadd.f32 %v1248, %v1419
    %v1429 = vadd.f32 %v1251, %v1419
    %v1430 = vadd.f32 %v1254, %v1419
    %v1431 = vadd.f32 %v1257, %v1419
    %v1432 = vadd.f32 %v1260, %v1419
    %v1433 = vadd.f32 %v1263, %v1419
    %v1434 = vadd.f32 %v1266, %v1419
    %v1435 = vadd.f32 %v1269, %v1419
    %v1436 = vadd.f32 %v1272, %v1419
    %v1437 = vadd.f32 %v1275, %v1419
    %v1438 = vadd.f32 %v1278, %v1419
    %v1439 = vadd.f32 %v1281, %v1419
    %v1440 = vadd.f32 %v1284, %v1419
    %v1441 = vadd.f32 %v1287, %v1419
    %v1442 = vadd.f32 %v1290, %v1419
    %v1443 = vadd.f32 %v1293, %v1419
    %v1444 = vadd.f32 %v1296, %v1419
    %v1445 = vadd.f32 %v1299, %v1419
    %v1446 = vadd.f32 %v1302, %v1419
    %v1447 = vadd.f32 %v1305, %v1419
    %v1448 = vadd.f32 %v1308, %v1419
    %v1449 = vadd.f32 %v1311, %v1419
    %v1450 = vadd.f32 %v1314, %v1419
    %v1451 = vadd.f32 %v1317, %v1419
    %v1452 = vadd.f32 %v1320, %v1419
    %v1453 = vadd.f32 %v1323, %v1419
    %v1454 = vadd.f32 %v1326, %v1419
    %v1455 = vadd.f32 %v1329, %v1419
    %v1456 = vadd.f32 %v1332, %v1419
    %v1457 = vadd.f32 %v1335, %v1419
    %v1458 = vadd.f32 %v1338, %v1419
    %v1459 = vadd.f32 %v1341, %v1419
    %v1460 = vadd.f32 %v1344, %v1419
    %v1461 = vadd.f32 %v1347, %v1419
    %v1462 = vadd.f32 %v1350, %v1419
    %v1463 = vadd.f32 %v1353, %v1419
    %v1464 = vadd.f32 %v1356, %v1419
    %v1465 = vadd.f32 %v1359, %v1419
    %v1466 = vadd.f32 %v1362, %v1419
    %v1467 = vadd.f32 %v1365, %v1419
    %v1468 = vadd.f32 %v1368, %v1419
    %v1469 = vadd.f32 %v1371, %v1419
    %v1470 = vadd.f32 %v1374, %v1419
    %v1471 = vadd.f32 %v1377, %v1419
    %v1472 = vadd.f32 %v1380, %v1419
    %v1473 = vadd.f32 %v1383, %v1419
    %v1474 = vadd.f32 %v1386, %v1419
    %v1475 = vadd.f32 %v1389, %v1419
    %v1476 = vadd.f32 %v1392, %v1419
    %v1477 = vadd.f32 %v1395, %v1419
    %v1478 = vadd.f32 %v1398, %v1419
    %v1479 = vadd.f32 %v1401, %v1419
    %v1480 = vadd.f32 %v1404, %v1419
    %v1481 = vadd.f32 %v1407, %v1419
    %v1482 = vadd.f32 %v1410, %v1419
    %v1483 = vadd.f32 %v1413, %v1419
    %v1484 = vadd.f32 %v1416, %v1419
    %v1549 = vlaneseq
    %v1550 = vand.u32 %v1549, 127
    %v1551 = vperm.slane %v1421, %v1550
    %v1552 = vadd.s32 %v1550, 4294967288
    %v1553 = vperm.slane %v1422, %v1552
    %vm1554 = vcmask 130112
    %v1555 = vsel %vm1554, %v1553, %v1551
    %v1556 = vperm.slane %v1423, %v1550
    %v1557 = vperm.slane %v1424, %v1552
    %v1558 = vsel %vm1554, %v1557, %v1556
    %v1559 = vperm.slane %v1425, %v1550
    %v1560 = vperm.slane %v1426, %v1552
    %v1561 = vsel %vm1554, %v1560, %v1559
    %v1562 = vperm.slane %v1427, %v1550
    %v1563 = vperm.slane %v1428, %v1552
    %v1564 = vsel %vm1554, %v1563, %v1562
    %v1565 = vperm.slane %v1429, %v1550
    %v1566 = vperm.slane %v1430, %v1552
    %v1567 = vsel %vm1554, %v1566, %v1565
    %v1568 = vperm.slane %v1431, %v1550
    %v1569 = vperm.slane %v1432, %v1552
    %v1570 = vsel %vm1554, %v1569, %v1568
    %v1571 = vperm.slane %v1433, %v1550
    %v1572 = vperm.slane %v1434, %v1552
    %v1573 = vsel %vm1554, %v1572, %v1571
    %v1574 = vperm.slane %v1435, %v1550
    %v1575 = vperm.slane %v1436, %v1552
    %v1576 = vsel %vm1554, %v1575, %v1574
    %v1577 = vperm.slane %v1437, %v1550
    %v1578 = vperm.slane %v1438, %v1552
    %v1579 = vsel %vm1554, %v1578, %v1577
    %v1580 = vperm.slane %v1439, %v1550
    %v1581 = vperm.slane %v1440, %v1552
    %v1582 = vsel %vm1554, %v1581, %v1580
    %v1583 = vperm.slane %v1441, %v1550
    %v1584 = vperm.slane %v1442, %v1552
    %v1585 = vsel %vm1554, %v1584, %v1583
    %v1586 = vperm.slane %v1443, %v1550
    %v1587 = vperm.slane %v1444, %v1552
    %v1588 = vsel %vm1554, %v1587, %v1586
    %v1589 = vperm.slane %v1445, %v1550
    %v1590 = vperm.slane %v1446, %v1552
    %v1591 = vsel %vm1554, %v1590, %v1589
    %v1592 = vperm.slane %v1447, %v1550
    %v1593 = vperm.slane %v1448, %v1552
    %v1594 = vsel %vm1554, %v1593, %v1592
    %v1595 = vperm.slane %v1449, %v1550
    %v1596 = vperm.slane %v1450, %v1552
    %v1597 = vsel %vm1554, %v1596, %v1595
    %v1598 = vperm.slane %v1451, %v1550
    %v1599 = vperm.slane %v1452, %v1552
    %v1600 = vsel %vm1554, %v1599, %v1598
    %v1601 = vperm.slane %v1453, %v1550
    %v1602 = vperm.slane %v1454, %v1552
    %v1603 = vsel %vm1554, %v1602, %v1601
    %v1604 = vperm.slane %v1455, %v1550
    %v1605 = vperm.slane %v1456, %v1552
    %v1606 = vsel %vm1554, %v1605, %v1604
    %v1607 = vperm.slane %v1457, %v1550
    %v1608 = vperm.slane %v1458, %v1552
    %v1609 = vsel %vm1554, %v1608, %v1607
    %v1610 = vperm.slane %v1459, %v1550
    %v1611 = vperm.slane %v1460, %v1552
    %v1612 = vsel %vm1554, %v1611, %v1610
    %v1613 = vperm.slane %v1461, %v1550
    %v1614 = vperm.slane %v1462, %v1552
    %v1615 = vsel %vm1554, %v1614, %v1613
    %v1616 = vperm.slane %v1463, %v1550
    %v1617 = vperm.slane %v1464, %v1552
    %v1618 = vsel %vm1554, %v1617, %v1616
    %v1619 = vperm.slane %v1465, %v1550
    %v1620 = vperm.slane %v1466, %v1552
    %v1621 = vsel %vm1554, %v1620, %v1619
    %v1622 = vperm.slane %v1467, %v1550
    %v1623 = vperm.slane %v1468, %v1552
    %v1624 = vsel %vm1554, %v1623, %v1622
    %v1625 = vperm.slane %v1469, %v1550
    %v1626 = vperm.slane %v1470, %v1552
    %v1627 = vsel %vm1554, %v1626, %v1625
    %v1628 = vperm.slane %v1471, %v1550
    %v1629 = vperm.slane %v1472, %v1552
    %v1630 = vsel %vm1554, %v1629, %v1628
    %v1631 = vperm.slane %v1473, %v1550
    %v1632 = vperm.slane %v1474, %v1552
    %v1633 = vsel %vm1554, %v1632, %v1631
    %v1634 = vperm.slane %v1475, %v1550
    %v1635 = vperm.slane %v1476, %v1552
    %v1636 = vsel %vm1554, %v1635, %v1634
    %v1637 = vperm.slane %v1477, %v1550
    %v1638 = vperm.slane %v1478, %v1552
    %v1639 = vsel %vm1554, %v1638, %v1637
    %v1640 = vperm.slane %v1479, %v1550
    %v1641 = vperm.slane %v1480, %v1552
    %v1642 = vsel %vm1554, %v1641, %v1640
    %v1643 = vperm.slane %v1481, %v1550
    %v1644 = vperm.slane %v1482, %v1552
    %v1645 = vsel %vm1554, %v1644, %v1643
    %v1646 = vperm.slane %v1483, %v1550
    %v1647 = vperm.slane %v1484, %v1552
    %v1648 = vsel %vm1554, %v1647, %v1646
    %vm1649 = vcmask 1041409
    %v1650 = vsel %vm1649, %v1558, %v1555
    %vm1651 = vcmask 1042434
    %v1652 = vsel %vm1651, %v1561, %v1650
    %vm1653 = vcmask 1043459
    %v1654 = vsel %vm1653, %v1564, %v1652
    %vm1655 = vcmask 1044484
    %v1656 = vsel %vm1655, %v1567, %v1654
    %vm1657 = vcmask 1045509
    %v1658 = vsel %vm1657, %v1570, %v1656
    %vm1659 = vcmask 1046534
    %v1660 = vsel %vm1659, %v1573, %v1658
    %vm1661 = vcmask 1047559
    %v1662 = vsel %vm1661, %v1576, %v1660
    %v1663 = vsel %vm1649, %v1582, %v1579
    %v1664 = vsel %vm1651, %v1585, %v1663
    %v1665 = vsel %vm1653, %v1588, %v1664
    %v1666 = vsel %vm1655, %v1591, %v1665
    %v1667 = vsel %vm1657, %v1594, %v1666
    %v1668 = vsel %vm1659, %v1597, %v1667
    %v1669 = vsel %vm1661, %v1600, %v1668
    %v1670 = vsel %vm1649, %v1606, %v1603
    %v1671 = vsel %vm1651, %v1609, %v1670
    %v1672 = vsel %vm1653, %v1612, %v1671
    %v1673 = vsel %vm1655, %v1615, %v1672
    %v1674 = vsel %vm1657, %v1618, %v1673
    %v1675 = vsel %vm1659, %v1621, %v1674
    %v1676 = vsel %vm1661, %v1624, %v1675
    %v1677 = vsel %vm1649, %v1630, %v1627
    %v1678 = vsel %vm1651, %v1633, %v1677
    %v1679 = vsel %vm1653, %v1636, %v1678
    %v1680 = vsel %vm1655, %v1639, %v1679
    %v1681 = vsel %vm1657, %v1642, %v1680
    %v1682 = vsel %vm1659, %v1645, %v1681
    %v1683 = vsel %vm1661, %v1648, %v1682
    %1688 = vxpose.xlu0.b32.start [1/16] %v1662, 128
    %1689 = vxpose.xlu0.b32.cont [2/16] %v1669, 128
    %1690 = vxpose.xlu0.b32.cont [3/16] %v1676, 128
    %1691 = vxpose.xlu0.b32.cont [4/16] %v1683, 128
    %1692 = vxpose.xlu0.b32.cont [5/16] 0.0, 128
    %1693 = vxpose.xlu0.b32.cont [6/16] 0.0, 128
    %1694 = vxpose.xlu0.b32.cont [7/16] 0.0, 128
    %1695 = vxpose.xlu0.b32.cont [8/16] 0.0, 128
    %1696 = vxpose.xlu0.b32.cont [9/16] 0.0, 128
    %1697 = vxpose.xlu0.b32.cont [10/16] 0.0, 128
    %1698 = vxpose.xlu0.b32.cont [11/16] 0.0, 128
    %1699 = vxpose.xlu0.b32.cont [12/16] 0.0, 128
    %1700 = vxpose.xlu0.b32.cont [13/16] 0.0, 128
    %1701 = vxpose.xlu0.b32.cont [14/16] 0.0, 128
    %1702 = vxpose.xlu0.b32.cont [15/16] 0.0, 128
    %1703 = vxpose.xlu0.b32.end [16/16] 0.0, 128
    %v1704 = vpop.trf.xlu0
    %v1705 = vpop.trf.xlu0
    %v1706 = vpop.trf.xlu0
    %v1707 = vpop.trf.xlu0
    %v1708 = vpop.trf.xlu0
    %v1709 = vpop.trf.xlu0
    %v1710 = vpop.trf.xlu0
    %v1711 = vpop.trf.xlu0
    %v1712 = vpop.trf.xlu0
    %v1713 = vpop.trf.xlu0
    %v1714 = vpop.trf.xlu0
    %v1715 = vpop.trf.xlu0
    %v1716 = vpop.trf.xlu0
    %v1717 = vpop.trf.xlu0
    %v1718 = vpop.trf.xlu0
    %v1719 = vpop.trf.xlu0
    %v1720 = vld [vmem:[%s1] sm:$0xff]
    %v1721 = vld [vmem:[%s1 + $0x8] sm:$0xff]
    %vm1722 = vcmp.ne.s32.totalorder %v1720, 0
    %vm1723 = vcmp.ne.s32.totalorder %v1721, 0
    %v1724 = vsel %vm1722, %v1704, -1e+30
    %v1725 = vsel %vm1723, %v1705, -1e+30
    %v1726 = vsel %vm99, %v1724, -inf
    %v1727 = vsel %vm99, %v1725, -inf
    %v1728 = vmax.f32 %v1726, %v1727
    %v1729 = vrot.slane %v1728, 4
    %v1730 = vmax.f32 %v1728, %v1729
    %v1731 = vrot.slane %v1730, 2
    %v1732 = vmax.f32 %v1730, %v1731
    %v1733 = vrot.slane %v1732, 1
    %v1734 = vmax.f32 %v1732, %v1733
    %v1735 = vsub.f32 %v1724, %v1734
    %v1736 = vsub.f32 %v1725, %v1734
    %v1737 = vmul.f32 %v1735, 1.442695
    %v1738 = vpow.pop %v1737
    %v1739 = vmul.f32 %v1736, 1.442695
    %v1740 = vpow.pop %v1739
    %v1741 = vsel %vm99, %v1738, 0.0
    %v1742 = vsel %vm99, %v1740, 0.0
    %v1743 = vadd.f32 %v1741, %v1742
    %v1744 = vrot.slane %v1743, 4
    %v1745 = vadd.f32 %v1743, %v1744
    %v1746 = vrot.slane %v1745, 2
    %v1747 = vadd.f32 %v1745, %v1746
    %v1748 = vrot.slane %v1747, 1
    %v1749 = vadd.f32 %v1747, %v1748
    %v1750 = vrcp.pop %v1749
    %v1751 = vmul.f32 %v1749, %v1750
    %v1752 = vsub.f32 2.0, %v1751
    %v1753 = vmul.f32 %v1750, %v1752
    %v1754 = vmul.f32 %v1738, %v1753
    %v1755 = vmul.f32 %v1740, %v1753
    %1756 = vst.msk [vmem:[#allocation2] sm:$0xff] %vm99, %v1754
    %1757 = vst.msk [vmem:[#allocation2 + $0x8] sm:$0xff] %vm99, %v1755
    // Predicated region
    $region18: #{tpu_custom_call.1} parent=1 // pred_check
      _
    $region19: #{tpu_custom_call.1} parent=1 // pred_check_branch
      %1759 = sbr.rel (0) target = $region21
    $region20: #{tpu_custom_call.1} parent=1 // pred_region
      %1761 = vsyncadd [#allocation3], 0
      %s1762 = sshll.u32 [#allocation2], 4
      %s1763 = int_to_ptr.vmem [resolvable:$true] %s1762
      %s1764 = sshll.u32 %s4, 4
      %s1765 = int_to_ptr.hbm [resolvable:$true] %s1764
      %1770 = dma.vmem_to_hbm [thread:$0]  %s1763, 256, %s1765, [#allocation3], 128, 128, 8
    $region21: #{tpu_custom_call.1} parent=1 // pred_fallthru
      _
    // Predicated region
    $region22: #{tpu_custom_call.1} parent=1 // pred_check
      _
    $region23: #{tpu_custom_call.1} parent=1 // pred_check_branch
      %1772 = sbr.rel (0) target = $region25
    $region24: #{tpu_custom_call.1} parent=1 // pred_region
      %1774 = dma.done [#allocation3], 256
    $region25: #{tpu_custom_call.1} parent=1 // pred_fallthru
      _
    %1775 = vsyncpa [#allocation3], 1

</llo_original>
